<compile_context>
chip_gen: v7x
topology: tpu7x:2x2x1
jax: 0.10.0
libtpu: 0.0.40
codegen_flags: <defaults>
</compile_context>

<pallas_src>
import jax
import jax.numpy as jnp
from jax import lax
from jax.experimental import pallas as pl
from jax.experimental.pallas import tpu as pltpu


# ----------------------------------------------------------------------------
# Fused kernel: per-block input projection prologue + sequential recurrence.
# ----------------------------------------------------------------------------
def _make_lstm_kernel(nlayer, nout, block_t, batch, nin):
    H, Tb, B, C = nout, block_t, batch, nin
    G = 4 * H

    def kernel(*refs):
        # refs = (x, h0, c0, Wx0, Wh0, b0, w_1..w_{L-1}, b_1..b_{L-1},
        #         out, xproj_buf, h_st, c_st)
        x_ref, h0_ref, c0_ref, wx0_ref, wh0_ref, b0_ref = refs[:6]
        w_refs = refs[6:6 + (nlayer - 1)]                 # (2H, 4H) each
        b_refs = refs[6 + (nlayer - 1):6 + 2 * (nlayer - 1)]   # (1, 4H) each
        out_ref = refs[6 + 2 * (nlayer - 1)]
        xproj_buf, h_st, c_st = refs[-3:]

        blk = pl.program_id(0)

        # State init keyed on the (sequential, "arbitrary") time-block index only.
        @pl.when(blk == 0)
        def _():
            h_st[...] = h0_ref[...].astype(jnp.float32)
            c_st[...] = c0_ref[...].astype(jnp.float32)

        # ---- Block prologue: time-parallel layer-0 input projection ----------
        # One MXU pass over Tb*B rows; bias folded in here.
        xp = (jnp.dot(x_ref[...].reshape(Tb * B, C), wx0_ref[...],
                      preferred_element_type=jnp.float32)
              + b0_ref[...])
        xproj_buf[...] = xp.reshape(Tb, B, G)

        # ---- Hoisted loop invariants (built ONCE per grid step) --------------
        wh0 = wh0_ref[...]                                  # (H, 4H)
        w_rest = [w_refs[l][...] for l in range(nlayer - 1)]   # (2H, 4H)
        b_rest = [b_refs[l][...] for l in range(nlayer - 1)]   # (1, 4H)

        lane = lax.broadcasted_iota(jnp.int32, (B, G), 1)
        is_sig = lane < 3 * H
        gate_scale = jnp.where(is_sig, 0.5, 1.0).astype(jnp.float32)  # x/2 on sig lanes
        gate_shift = jnp.where(is_sig, 0.5, 0.0).astype(jnp.float32)  # +0.5 on sig lanes

        def act_gates(pre, ct):
            # sigmoid(x) = 0.5*tanh(x/2) + 0.5 -> single EUP tanh over (B, 4H),
            # affine fix-up lands on the VALU (which has slack).
            t = jnp.tanh(pre * gate_scale)
            a = t * gate_scale + gate_shift
            g1 = a[:, 0 * H:1 * H]
            g2 = a[:, 1 * H:2 * H]
            g3 = a[:, 2 * H:3 * H]
            o = a[:, 3 * H:4 * H]
            ct1 = ct * g1 + o * g2
            ht1 = jnp.tanh(ct1) * g3
            return ht1, ct1

        def step(tt, carry):
            hs, cs = carry
            # Layer 0: x-projection (incl. bias) precomputed in the prologue.
            pre = xproj_buf[tt] + jnp.dot(hs[0], wh0,
                                          preferred_element_type=jnp.float32)
            ht1, ct1 = act_gates(pre, cs[0])
            new_h, new_c = [ht1], [ct1]
            xt = ht1
            for l in range(1, nlayer):
                # One fused dot on the lane-concatenated (B, 2H) operand.
                xcat = jnp.concatenate([xt, hs[l]], axis=1)
                pre = (jnp.dot(xcat, w_rest[l - 1],
                               preferred_element_type=jnp.float32)
                       + b_rest[l - 1])
                ht1, ct1 = act_gates(pre, cs[l])
                new_h.append(ht1)
                new_c.append(ct1)
                xt = ht1
            out_ref[tt] = xt.astype(out_ref.dtype)
            return (tuple(new_h), tuple(new_c))

        hs0 = tuple(h_st[l] for l in range(nlayer))
        cs0 = tuple(c_st[l] for l in range(nlayer))
        hs, cs = lax.fori_loop(0, Tb, step, (hs0, cs0), unroll=True)

        # Carry states to the next grid step.
        for l in range(nlayer):
            h_st[l] = hs[l]
            c_st[l] = cs[l]

    return kernel


def lstm_forward(x, h, ws, bs, *, nout, block_t=32):
    """x: (T, B, C); h = (h0, c0) each (nlayer, B, H); ws[l]: (in_l+H, 4H); bs[l]: (1, 4H)."""
    h0, c0 = h
    T, B, C = x.shape
    nlayer = h0.shape[0]
    H = nout
    G = 4 * H

    w0 = ws[0]                      # (C + H, 4H)
    wx0 = w0[:C, :]                 # (C, 4H)
    wh0 = w0[C:, :]                 # (H, 4H)
    b0 = bs[0]                      # (1, 4H)

    # Pad T up to a multiple of the time block (tail rows computed then dropped).
    Tb = max(1, min(block_t, T))
    T_pad = pl.cdiv(T, Tb) * Tb
    if T_pad != T:
        x = jnp.pad(x, ((0, T_pad - T), (0, 0), (0, 0)))

    kernel = _make_lstm_kernel(nlayer, H, Tb, B, C)

    in_specs = [
        pl.BlockSpec((Tb, B, C), lambda i: (i, 0, 0)),        # x block (streamed)
        pl.BlockSpec((nlayer, B, H), lambda i: (0, 0, 0)),    # h0 (resident)
        pl.BlockSpec((nlayer, B, H), lambda i: (0, 0, 0)),    # c0 (resident)
        pl.BlockSpec((C, G), lambda i: (0, 0)),               # Wx layer 0
        pl.BlockSpec((H, G), lambda i: (0, 0)),               # Wh layer 0
        pl.BlockSpec((1, G), lambda i: (0, 0)),               # b layer 0
    ]
    for l in range(1, nlayer):
        in_specs.append(pl.BlockSpec((2 * H, G), lambda i: (0, 0)))   # weights l>=1
    for l in range(1, nlayer):
        in_specs.append(pl.BlockSpec((1, G), lambda i: (0, 0)))       # biases  l>=1

    out = pl.pallas_call(
        kernel,
        out_shape=jax.ShapeDtypeStruct((T_pad, B, H), x.dtype),
        grid_spec=pltpu.PrefetchScalarGridSpec(
            num_scalar_prefetch=0,
            grid=(T_pad // Tb,),
            in_specs=in_specs,
            out_specs=pl.BlockSpec((Tb, B, H), lambda i: (i, 0, 0)),
            scratch_shapes=[
                pltpu.VMEM((Tb, B, G), jnp.float32),          # per-block xproj
                pltpu.VMEM((nlayer, B, H), jnp.float32),      # carried hidden states
                pltpu.VMEM((nlayer, B, H), jnp.float32),      # carried cell states
            ],
        ),
        compiler_params=pltpu.CompilerParams(
            dimension_semantics=("arbitrary",),               # sequential recurrence
            vmem_limit_bytes=48 * 1024 * 1024,                # headroom on all gens
        ),
    )(x, h0, c0, wx0, wh0, b0,
      *[ws[l] for l in range(1, nlayer)],
      *[bs[l] for l in range(1, nlayer)])

    if T_pad != T:
        out = out[:T]

    # Faithful to the PyTorch module: it returns the ORIGINAL (ht, ct).
    return out, (h0, c0)


def lstm_reference(x, h, ws, bs, *, nout):
    """Pure-JAX reference mirroring the PyTorch loops exactly."""
    h0, c0 = h
    T = x.shape[0]
    nlayer = h0.shape[0]
    H = nout
    hts = [h0[i] for i in range(nlayer)]
    cts = [c0[i] for i in range(nlayer)]
    outputs = []
    for t in range(T):
        xt = x[t]
        for l in range(nlayer):
            xcat = jnp.concatenate([xt, hts[l]], axis=1)
            pre = xcat @ ws[l] + bs[l][0]
            g1 = jax.nn.sigmoid(pre[:, 0 * H:1 * H])
            g2 = jax.nn.sigmoid(pre[:, 1 * H:2 * H])
            g3 = jax.nn.sigmoid(pre[:, 2 * H:3 * H])
            o = jnp.tanh(pre[:, 3 * H:4 * H])
            ct1 = cts[l] * g1 + o * g2
            ht1 = jnp.tanh(ct1) * g3
            hts[l], cts[l] = ht1, ct1
            xt = ht1
        outputs.append(xt)
    return jnp.stack(outputs, axis=0), (h0, c0)


if __name__ == "__main__":
    # Small shapes; T=10 with block_t=4 exercises both the padded tail and the
    # cross-grid-step state carry.
    T, B, nin, nout, nlayer = 10, 8, 16, 32, 2

    key = jax.random.PRNGKey(0)
    keys = jax.random.split(key, 3 + 2 * nlayer)

    x = jax.random.normal(keys[0], (T, B, nin), dtype=jnp.float32)
    h0 = jax.random.normal(keys[1], (nlayer, B, nout), dtype=jnp.float32)
    c0 = jax.random.normal(keys[2], (nlayer, B, nout), dtype=jnp.float32)

    # Deterministic parameter init (PyTorch-Linear-style uniform bounds).
    ws, bs = [], []
    for l in range(nlayer):
        fan_in = (nin if l == 0 else nout) + nout
        bound = 1.0 / jnp.sqrt(jnp.float32(fan_in))
        w = jax.random.uniform(keys[3 + l], (fan_in, 4 * nout),
                               minval=-bound, maxval=bound, dtype=jnp.float32)
        b = jax.random.uniform(keys[3 + nlayer + l], (1, 4 * nout),
                               minval=-bound, maxval=bound, dtype=jnp.float32)
        ws.append(w)
        bs.append(b)

    out, (hT, cT) = lstm_forward(x, (h0, c0), ws, bs, nout=nout, block_t=4)
    out = jax.block_until_ready(out)

    ref_out, _ = lstm_reference(x, (h0, c0), ws, bs, nout=nout)
    assert out.shape == (T, B, nout), out.shape
    assert jnp.allclose(out, ref_out, atol=5e-5, rtol=5e-5), "mismatch vs reference"

    print("KERNEL_OK")
</pallas_src>

<mosaic_0001>
module attributes {stable_mosaic.version = 11 : i64} {
  func.func @kernel(%arg0: i32, %arg1: memref<4x8x16xf32, #tpu.memory_space<vmem>>, %arg2: memref<2x8x32xf32, #tpu.memory_space<vmem>>, %arg3: memref<2x8x32xf32, #tpu.memory_space<vmem>>, %arg4: memref<16x128xf32, #tpu.memory_space<vmem>>, %arg5: memref<32x128xf32, #tpu.memory_space<vmem>>, %arg6: memref<1x128xf32, #tpu.memory_space<vmem>>, %arg7: memref<64x128xf32, #tpu.memory_space<vmem>>, %arg8: memref<1x128xf32, #tpu.memory_space<vmem>>, %arg9: memref<4x8x32xf32, #tpu.memory_space<vmem>>, %arg10: memref<4x8x128xf32, #tpu.memory_space<vmem>>, %arg11: memref<2x8x32xf32, #tpu.memory_space<vmem>>, %arg12: memref<2x8x32xf32, #tpu.memory_space<vmem>>) attributes {dimension_semantics = [#tpu.dimension_semantics<arbitrary>], iteration_bounds = array<i64: 3>, scalar_prefetch = 0 : i64, scratch_operands = 3 : i64, tpu.core_type = #tpu.core_type<tc>, window_params = [{transform_indices = @transform_0, window_bounds = array<i64: 4, 8, 16>}, {pipeline_mode = #tpu.pipeline_mode<synchronous>, transform_indices = @transform_1, window_bounds = array<i64: 2, 8, 32>}, {pipeline_mode = #tpu.pipeline_mode<synchronous>, transform_indices = @transform_2, window_bounds = array<i64: 2, 8, 32>}, {pipeline_mode = #tpu.pipeline_mode<synchronous>, transform_indices = @transform_3, window_bounds = array<i64: 16, 128>}, {pipeline_mode = #tpu.pipeline_mode<synchronous>, transform_indices = @transform_4, window_bounds = array<i64: 32, 128>}, {pipeline_mode = #tpu.pipeline_mode<synchronous>, transform_indices = @transform_5, window_bounds = array<i64: 1, 128>}, {pipeline_mode = #tpu.pipeline_mode<synchronous>, transform_indices = @transform_6, window_bounds = array<i64: 64, 128>}, {pipeline_mode = #tpu.pipeline_mode<synchronous>, transform_indices = @transform_7, window_bounds = array<i64: 1, 128>}, {transform_indices = @transform_8, window_bounds = array<i64: 4, 8, 32>}]} {
    %c0_i32 = arith.constant 0 : i32
    %0 = arith.cmpi eq, %arg0, %c0_i32 : i32
    %1 = arith.extui %0 : i1 to i32
    %c0_i32_0 = arith.constant 0 : i32
    %2 = arith.cmpi ne, %1, %c0_i32_0 : i32
    scf.if %2 {
      %c0_68 = arith.constant 0 : index
      %c0_69 = arith.constant 0 : index
      %c0_70 = arith.constant 0 : index
      %200 = vector.load %arg2[%c0_68, %c0_69, %c0_70] : memref<2x8x32xf32, #tpu.memory_space<vmem>>, vector<2x8x32xf32>
      %c0_71 = arith.constant 0 : index
      %c0_72 = arith.constant 0 : index
      %c0_73 = arith.constant 0 : index
      %201 = vector.load %arg11[%c0_71, %c0_72, %c0_73] : memref<2x8x32xf32, #tpu.memory_space<vmem>>, vector<2x8x32xf32>
      tpu.vector_store %arg11[%c0_71, %c0_72, %c0_73], %200 {strides = array<i32>} : memref<2x8x32xf32, #tpu.memory_space<vmem>>, vector<2x8x32xf32>,
      %c0_74 = arith.constant 0 : index
      %c0_75 = arith.constant 0 : index
      %c0_76 = arith.constant 0 : index
      %202 = vector.load %arg3[%c0_74, %c0_75, %c0_76] : memref<2x8x32xf32, #tpu.memory_space<vmem>>, vector<2x8x32xf32>
      %c0_77 = arith.constant 0 : index
      %c0_78 = arith.constant 0 : index
      %c0_79 = arith.constant 0 : index
      %203 = vector.load %arg12[%c0_77, %c0_78, %c0_79] : memref<2x8x32xf32, #tpu.memory_space<vmem>>, vector<2x8x32xf32>
      tpu.vector_store %arg12[%c0_77, %c0_78, %c0_79], %202 {strides = array<i32>} : memref<2x8x32xf32, #tpu.memory_space<vmem>>, vector<2x8x32xf32>,
    } else {
    }
    %c0 = arith.constant 0 : index
    %c0_1 = arith.constant 0 : index
    %c0_2 = arith.constant 0 : index
    %3 = vector.load %arg1[%c0, %c0_1, %c0_2] : memref<4x8x16xf32, #tpu.memory_space<vmem>>, vector<4x8x16xf32>
    %4 = vector.shape_cast %3 : vector<4x8x16xf32> to vector<32x16xf32>
    %c0_3 = arith.constant 0 : index
    %c0_4 = arith.constant 0 : index
    %5 = vector.load %arg4[%c0_3, %c0_4] : memref<16x128xf32, #tpu.memory_space<vmem>>, vector<16x128xf32>
    %cst = arith.constant dense<0.000000e+00> : vector<32x128xf32>
    %6 = tpu.matmul %4, %5, %cst {dimension_numbers = #tpu.dot_dimension_numbers<[1], [0], [0], [1], [0, 0, 1, 1], [], []>} : vector<32x16xf32>, vector<16x128xf32>, vector<32x128xf32> -> vector<32x128xf32>
    %c0_5 = arith.constant 0 : index
    %c0_6 = arith.constant 0 : index
    %7 = vector.load %arg6[%c0_5, %c0_6] : memref<1x128xf32, #tpu.memory_space<vmem>>, vector<1x128xf32>
    %8 = vector.broadcast %7 : vector<1x128xf32> to vector<32x128xf32>
    %9 = arith.addf %6, %8 : vector<32x128xf32>
    %10 = vector.shape_cast %9 : vector<32x128xf32> to vector<4x8x128xf32>
    %c0_7 = arith.constant 0 : index
    %c0_8 = arith.constant 0 : index
    %c0_9 = arith.constant 0 : index
    %11 = vector.load %arg10[%c0_7, %c0_8, %c0_9] : memref<4x8x128xf32, #tpu.memory_space<vmem>>, vector<4x8x128xf32>
    tpu.vector_store %arg10[%c0_7, %c0_8, %c0_9], %10 {strides = array<i32>} : memref<4x8x128xf32, #tpu.memory_space<vmem>>, vector<4x8x128xf32>,
    %c0_10 = arith.constant 0 : index
    %c0_11 = arith.constant 0 : index
    %12 = vector.load %arg5[%c0_10, %c0_11] : memref<32x128xf32, #tpu.memory_space<vmem>>, vector<32x128xf32>
    %c0_12 = arith.constant 0 : index
    %c0_13 = arith.constant 0 : index
    %13 = vector.load %arg7[%c0_12, %c0_13] : memref<64x128xf32, #tpu.memory_space<vmem>>, vector<64x128xf32>
    %c0_14 = arith.constant 0 : index
    %c0_15 = arith.constant 0 : index
    %14 = vector.load %arg8[%c0_14, %c0_15] : memref<1x128xf32, #tpu.memory_space<vmem>>, vector<1x128xf32>
    %15 = tpu.iota {dimensions = array<i32: 1>} : vector<8x128xi32>
    %c96_i32 = arith.constant 96 : i32
    %16 = vector.broadcast %c96_i32 : i32 to vector<8x128xi32>
    %17 = arith.cmpi slt, %15, %16 : vector<8x128xi32>
    %cst_16 = arith.constant 5.000000e-01 : f32
    %cst_17 = arith.constant 1.000000e+00 : f32
    %18 = vector.broadcast %cst_16 : f32 to vector<8x128xf32>
    %19 = vector.broadcast %cst_17 : f32 to vector<8x128xf32>
    %20 = arith.select %17, %18, %19 : vector<8x128xi1>, vector<8x128xf32>
    %cst_18 = arith.constant 5.000000e-01 : f32
    %cst_19 = arith.constant 0.000000e+00 : f32
    %21 = vector.broadcast %cst_18 : f32 to vector<8x128xf32>
    %22 = vector.broadcast %cst_19 : f32 to vector<8x128xf32>
    %23 = arith.select %17, %21, %22 : vector<8x128xi1>, vector<8x128xf32>
    %c0_20 = arith.constant 0 : index
    %c0_21 = arith.constant 0 : index
    %c0_22 = arith.constant 0 : index
    %24 = vector.load %arg11[%c0_20, %c0_21, %c0_22] : memref<2x8x32xf32, #tpu.memory_space<vmem>>, vector<1x8x32xf32>
    %25 = vector.shape_cast %24 : vector<1x8x32xf32> to vector<8x32xf32>
    %c1 = arith.constant 1 : index
    %c0_23 = arith.constant 0 : index
    %c0_24 = arith.constant 0 : index
    %26 = vector.load %arg11[%c1, %c0_23, %c0_24] : memref<2x8x32xf32, #tpu.memory_space<vmem>>, vector<1x8x32xf32>
    %27 = vector.shape_cast %26 : vector<1x8x32xf32> to vector<8x32xf32>
    %c0_25 = arith.constant 0 : index
    %c0_26 = arith.constant 0 : index
    %c0_27 = arith.constant 0 : index
    %28 = vector.load %arg12[%c0_25, %c0_26, %c0_27] : memref<2x8x32xf32, #tpu.memory_space<vmem>>, vector<1x8x32xf32>
    %29 = vector.shape_cast %28 : vector<1x8x32xf32> to vector<8x32xf32>
    %c1_28 = arith.constant 1 : index
    %c0_29 = arith.constant 0 : index
    %c0_30 = arith.constant 0 : index
    %30 = vector.load %arg12[%c1_28, %c0_29, %c0_30] : memref<2x8x32xf32, #tpu.memory_space<vmem>>, vector<1x8x32xf32>
    %31 = vector.shape_cast %30 : vector<1x8x32xf32> to vector<8x32xf32>
    %c0_i32_31 = arith.constant 0 : i32
    %32 = arith.index_cast %c0_i32_31 : i32 to index
    %c0_32 = arith.constant 0 : index
    %c0_33 = arith.constant 0 : index
    %33 = vector.load %arg10[%32, %c0_32, %c0_33] : memref<4x8x128xf32, #tpu.memory_space<vmem>>, vector<1x8x128xf32>
    %34 = vector.shape_cast %33 : vector<1x8x128xf32> to vector<8x128xf32>
    %cst_34 = arith.constant dense<0.000000e+00> : vector<8x128xf32>
    %35 = tpu.matmul %25, %12, %cst_34 {dimension_numbers = #tpu.dot_dimension_numbers<[1], [0], [0], [1], [0, 0, 1, 1], [], []>} : vector<8x32xf32>, vector<32x128xf32>, vector<8x128xf32> -> vector<8x128xf32>
    %36 = arith.addf %34, %35 : vector<8x128xf32>
    %37 = arith.mulf %36, %20 : vector<8x128xf32>
    %38 = math.tanh %37 : vector<8x128xf32>
    %39 = arith.mulf %38, %20 : vector<8x128xf32>
    %40 = arith.addf %39, %23 : vector<8x128xf32>
    %41 = vector.extract_strided_slice %40 {offsets = [0, 0], sizes = [8, 32], strides = [1, 1]} : vector<8x128xf32> to vector<8x32xf32>
    %42 = vector.extract_strided_slice %40 {offsets = [0, 32], sizes = [8, 32], strides = [1, 1]} : vector<8x128xf32> to vector<8x32xf32>
    %43 = vector.extract_strided_slice %40 {offsets = [0, 64], sizes = [8, 32], strides = [1, 1]} : vector<8x128xf32> to vector<8x32xf32>
    %44 = vector.extract_strided_slice %40 {offsets = [0, 96], sizes = [8, 32], strides = [1, 1]} : vector<8x128xf32> to vector<8x32xf32>
    %45 = arith.mulf %29, %41 : vector<8x32xf32>
    %46 = arith.mulf %44, %42 : vector<8x32xf32>
    %47 = arith.addf %45, %46 : vector<8x32xf32>
    %48 = math.tanh %47 : vector<8x32xf32>
    %49 = arith.mulf %48, %43 : vector<8x32xf32>
    %50 = tpu.concatenate %49, %27 in 1 : vector<8x32xf32>, vector<8x32xf32> -> vector<8x64xf32>
    %cst_35 = arith.constant dense<0.000000e+00> : vector<8x128xf32>
    %51 = tpu.matmul %50, %13, %cst_35 {dimension_numbers = #tpu.dot_dimension_numbers<[1], [0], [0], [1], [0, 0, 1, 1], [], []>} : vector<8x64xf32>, vector<64x128xf32>, vector<8x128xf32> -> vector<8x128xf32>
    %52 = vector.broadcast %14 : vector<1x128xf32> to vector<8x128xf32>
    %53 = arith.addf %51, %52 : vector<8x128xf32>
    %54 = arith.mulf %53, %20 : vector<8x128xf32>
    %55 = math.tanh %54 : vector<8x128xf32>
    %56 = arith.mulf %55, %20 : vector<8x128xf32>
    %57 = arith.addf %56, %23 : vector<8x128xf32>
    %58 = vector.extract_strided_slice %57 {offsets = [0, 0], sizes = [8, 32], strides = [1, 1]} : vector<8x128xf32> to vector<8x32xf32>
    %59 = vector.extract_strided_slice %57 {offsets = [0, 32], sizes = [8, 32], strides = [1, 1]} : vector<8x128xf32> to vector<8x32xf32>
    %60 = vector.extract_strided_slice %57 {offsets = [0, 64], sizes = [8, 32], strides = [1, 1]} : vector<8x128xf32> to vector<8x32xf32>
    %61 = vector.extract_strided_slice %57 {offsets = [0, 96], sizes = [8, 32], strides = [1, 1]} : vector<8x128xf32> to vector<8x32xf32>
    %62 = arith.mulf %31, %58 : vector<8x32xf32>
    %63 = arith.mulf %61, %59 : vector<8x32xf32>
    %64 = arith.addf %62, %63 : vector<8x32xf32>
    %65 = math.tanh %64 : vector<8x32xf32>
    %66 = arith.mulf %65, %60 : vector<8x32xf32>
    %67 = arith.index_cast %c0_i32_31 : i32 to index
    %c0_36 = arith.constant 0 : index
    %c0_37 = arith.constant 0 : index
    %68 = vector.load %arg9[%67, %c0_36, %c0_37] : memref<4x8x32xf32, #tpu.memory_space<vmem>>, vector<1x8x32xf32>
    %69 = vector.shape_cast %68 : vector<1x8x32xf32> to vector<8x32xf32>
    %70 = vector.shape_cast %66 : vector<8x32xf32> to vector<1x8x32xf32>
    tpu.vector_store %arg9[%67, %c0_36, %c0_37], %70 {strides = array<i32>} : memref<4x8x32xf32, #tpu.memory_space<vmem>>, vector<1x8x32xf32>,
    %c1_i32 = arith.constant 1 : i32
    %71 = arith.index_cast %c1_i32 : i32 to index
    %c0_38 = arith.constant 0 : index
    %c0_39 = arith.constant 0 : index
    %72 = vector.load %arg10[%71, %c0_38, %c0_39] : memref<4x8x128xf32, #tpu.memory_space<vmem>>, vector<1x8x128xf32>
    %73 = vector.shape_cast %72 : vector<1x8x128xf32> to vector<8x128xf32>
    %cst_40 = arith.constant dense<0.000000e+00> : vector<8x128xf32>
    %74 = tpu.matmul %49, %12, %cst_40 {dimension_numbers = #tpu.dot_dimension_numbers<[1], [0], [0], [1], [0, 0, 1, 1], [], []>} : vector<8x32xf32>, vector<32x128xf32>, vector<8x128xf32> -> vector<8x128xf32>
    %75 = arith.addf %73, %74 : vector<8x128xf32>
    %76 = arith.mulf %75, %20 : vector<8x128xf32>
    %77 = math.tanh %76 : vector<8x128xf32>
    %78 = arith.mulf %77, %20 : vector<8x128xf32>
    %79 = arith.addf %78, %23 : vector<8x128xf32>
    %80 = vector.extract_strided_slice %79 {offsets = [0, 0], sizes = [8, 32], strides = [1, 1]} : vector<8x128xf32> to vector<8x32xf32>
    %81 = vector.extract_strided_slice %79 {offsets = [0, 32], sizes = [8, 32], strides = [1, 1]} : vector<8x128xf32> to vector<8x32xf32>
    %82 = vector.extract_strided_slice %79 {offsets = [0, 64], sizes = [8, 32], strides = [1, 1]} : vector<8x128xf32> to vector<8x32xf32>
    %83 = vector.extract_strided_slice %79 {offsets = [0, 96], sizes = [8, 32], strides = [1, 1]} : vector<8x128xf32> to vector<8x32xf32>
    %84 = arith.mulf %47, %80 : vector<8x32xf32>
    %85 = arith.mulf %83, %81 : vector<8x32xf32>
    %86 = arith.addf %84, %85 : vector<8x32xf32>
    %87 = math.tanh %86 : vector<8x32xf32>
    %88 = arith.mulf %87, %82 : vector<8x32xf32>
    %89 = tpu.concatenate %88, %66 in 1 : vector<8x32xf32>, vector<8x32xf32> -> vector<8x64xf32>
    %cst_41 = arith.constant dense<0.000000e+00> : vector<8x128xf32>
    %90 = tpu.matmul %89, %13, %cst_41 {dimension_numbers = #tpu.dot_dimension_numbers<[1], [0], [0], [1], [0, 0, 1, 1], [], []>} : vector<8x64xf32>, vector<64x128xf32>, vector<8x128xf32> -> vector<8x128xf32>
    %91 = vector.broadcast %14 : vector<1x128xf32> to vector<8x128xf32>
    %92 = arith.addf %90, %91 : vector<8x128xf32>
    %93 = arith.mulf %92, %20 : vector<8x128xf32>
    %94 = math.tanh %93 : vector<8x128xf32>
    %95 = arith.mulf %94, %20 : vector<8x128xf32>
    %96 = arith.addf %95, %23 : vector<8x128xf32>
    %97 = vector.extract_strided_slice %96 {offsets = [0, 0], sizes = [8, 32], strides = [1, 1]} : vector<8x128xf32> to vector<8x32xf32>
    %98 = vector.extract_strided_slice %96 {offsets = [0, 32], sizes = [8, 32], strides = [1, 1]} : vector<8x128xf32> to vector<8x32xf32>
    %99 = vector.extract_strided_slice %96 {offsets = [0, 64], sizes = [8, 32], strides = [1, 1]} : vector<8x128xf32> to vector<8x32xf32>
    %100 = vector.extract_strided_slice %96 {offsets = [0, 96], sizes = [8, 32], strides = [1, 1]} : vector<8x128xf32> to vector<8x32xf32>
    %101 = arith.mulf %64, %97 : vector<8x32xf32>
    %102 = arith.mulf %100, %98 : vector<8x32xf32>
    %103 = arith.addf %101, %102 : vector<8x32xf32>
    %104 = math.tanh %103 : vector<8x32xf32>
    %105 = arith.mulf %104, %99 : vector<8x32xf32>
    %106 = arith.index_cast %c1_i32 : i32 to index
    %c0_42 = arith.constant 0 : index
    %c0_43 = arith.constant 0 : index
    %107 = vector.load %arg9[%106, %c0_42, %c0_43] : memref<4x8x32xf32, #tpu.memory_space<vmem>>, vector<1x8x32xf32>
    %108 = vector.shape_cast %107 : vector<1x8x32xf32> to vector<8x32xf32>
    %109 = vector.shape_cast %105 : vector<8x32xf32> to vector<1x8x32xf32>
    tpu.vector_store %arg9[%106, %c0_42, %c0_43], %109 {strides = array<i32>} : memref<4x8x32xf32, #tpu.memory_space<vmem>>, vector<1x8x32xf32>,
    %c2_i32 = arith.constant 2 : i32
    %110 = arith.index_cast %c2_i32 : i32 to index
    %c0_44 = arith.constant 0 : index
    %c0_45 = arith.constant 0 : index
    %111 = vector.load %arg10[%110, %c0_44, %c0_45] : memref<4x8x128xf32, #tpu.memory_space<vmem>>, vector<1x8x128xf32>
    %112 = vector.shape_cast %111 : vector<1x8x128xf32> to vector<8x128xf32>
    %cst_46 = arith.constant dense<0.000000e+00> : vector<8x128xf32>
    %113 = tpu.matmul %88, %12, %cst_46 {dimension_numbers = #tpu.dot_dimension_numbers<[1], [0], [0], [1], [0, 0, 1, 1], [], []>} : vector<8x32xf32>, vector<32x128xf32>, vector<8x128xf32> -> vector<8x128xf32>
    %114 = arith.addf %112, %113 : vector<8x128xf32>
    %115 = arith.mulf %114, %20 : vector<8x128xf32>
    %116 = math.tanh %115 : vector<8x128xf32>
    %117 = arith.mulf %116, %20 : vector<8x128xf32>
    %118 = arith.addf %117, %23 : vector<8x128xf32>
    %119 = vector.extract_strided_slice %118 {offsets = [0, 0], sizes = [8, 32], strides = [1, 1]} : vector<8x128xf32> to vector<8x32xf32>
    %120 = vector.extract_strided_slice %118 {offsets = [0, 32], sizes = [8, 32], strides = [1, 1]} : vector<8x128xf32> to vector<8x32xf32>
    %121 = vector.extract_strided_slice %118 {offsets = [0, 64], sizes = [8, 32], strides = [1, 1]} : vector<8x128xf32> to vector<8x32xf32>
    %122 = vector.extract_strided_slice %118 {offsets = [0, 96], sizes = [8, 32], strides = [1, 1]} : vector<8x128xf32> to vector<8x32xf32>
    %123 = arith.mulf %86, %119 : vector<8x32xf32>
    %124 = arith.mulf %122, %120 : vector<8x32xf32>
    %125 = arith.addf %123, %124 : vector<8x32xf32>
    %126 = math.tanh %125 : vector<8x32xf32>
    %127 = arith.mulf %126, %121 : vector<8x32xf32>
    %128 = tpu.concatenate %127, %105 in 1 : vector<8x32xf32>, vector<8x32xf32> -> vector<8x64xf32>
    %cst_47 = arith.constant dense<0.000000e+00> : vector<8x128xf32>
    %129 = tpu.matmul %128, %13, %cst_47 {dimension_numbers = #tpu.dot_dimension_numbers<[1], [0], [0], [1], [0, 0, 1, 1], [], []>} : vector<8x64xf32>, vector<64x128xf32>, vector<8x128xf32> -> vector<8x128xf32>
    %130 = vector.broadcast %14 : vector<1x128xf32> to vector<8x128xf32>
    %131 = arith.addf %129, %130 : vector<8x128xf32>
    %132 = arith.mulf %131, %20 : vector<8x128xf32>
    %133 = math.tanh %132 : vector<8x128xf32>
    %134 = arith.mulf %133, %20 : vector<8x128xf32>
    %135 = arith.addf %134, %23 : vector<8x128xf32>
    %136 = vector.extract_strided_slice %135 {offsets = [0, 0], sizes = [8, 32], strides = [1, 1]} : vector<8x128xf32> to vector<8x32xf32>
    %137 = vector.extract_strided_slice %135 {offsets = [0, 32], sizes = [8, 32], strides = [1, 1]} : vector<8x128xf32> to vector<8x32xf32>
    %138 = vector.extract_strided_slice %135 {offsets = [0, 64], sizes = [8, 32], strides = [1, 1]} : vector<8x128xf32> to vector<8x32xf32>
    %139 = vector.extract_strided_slice %135 {offsets = [0, 96], sizes = [8, 32], strides = [1, 1]} : vector<8x128xf32> to vector<8x32xf32>
    %140 = arith.mulf %103, %136 : vector<8x32xf32>
    %141 = arith.mulf %139, %137 : vector<8x32xf32>
    %142 = arith.addf %140, %141 : vector<8x32xf32>
    %143 = math.tanh %142 : vector<8x32xf32>
    %144 = arith.mulf %143, %138 : vector<8x32xf32>
    %145 = arith.index_cast %c2_i32 : i32 to index
    %c0_48 = arith.constant 0 : index
    %c0_49 = arith.constant 0 : index
    %146 = vector.load %arg9[%145, %c0_48, %c0_49] : memref<4x8x32xf32, #tpu.memory_space<vmem>>, vector<1x8x32xf32>
    %147 = vector.shape_cast %146 : vector<1x8x32xf32> to vector<8x32xf32>
    %148 = vector.shape_cast %144 : vector<8x32xf32> to vector<1x8x32xf32>
    tpu.vector_store %arg9[%145, %c0_48, %c0_49], %148 {strides = array<i32>} : memref<4x8x32xf32, #tpu.memory_space<vmem>>, vector<1x8x32xf32>,
    %c3_i32 = arith.constant 3 : i32
    %149 = arith.index_cast %c3_i32 : i32 to index
    %c0_50 = arith.constant 0 : index
    %c0_51 = arith.constant 0 : index
    %150 = vector.load %arg10[%149, %c0_50, %c0_51] : memref<4x8x128xf32, #tpu.memory_space<vmem>>, vector<1x8x128xf32>
    %151 = vector.shape_cast %150 : vector<1x8x128xf32> to vector<8x128xf32>
    %cst_52 = arith.constant dense<0.000000e+00> : vector<8x128xf32>
    %152 = tpu.matmul %127, %12, %cst_52 {dimension_numbers = #tpu.dot_dimension_numbers<[1], [0], [0], [1], [0, 0, 1, 1], [], []>} : vector<8x32xf32>, vector<32x128xf32>, vector<8x128xf32> -> vector<8x128xf32>
    %153 = arith.addf %151, %152 : vector<8x128xf32>
    %154 = arith.mulf %153, %20 : vector<8x128xf32>
    %155 = math.tanh %154 : vector<8x128xf32>
    %156 = arith.mulf %155, %20 : vector<8x128xf32>
    %157 = arith.addf %156, %23 : vector<8x128xf32>
    %158 = vector.extract_strided_slice %157 {offsets = [0, 0], sizes = [8, 32], strides = [1, 1]} : vector<8x128xf32> to vector<8x32xf32>
    %159 = vector.extract_strided_slice %157 {offsets = [0, 32], sizes = [8, 32], strides = [1, 1]} : vector<8x128xf32> to vector<8x32xf32>
    %160 = vector.extract_strided_slice %157 {offsets = [0, 64], sizes = [8, 32], strides = [1, 1]} : vector<8x128xf32> to vector<8x32xf32>
    %161 = vector.extract_strided_slice %157 {offsets = [0, 96], sizes = [8, 32], strides = [1, 1]} : vector<8x128xf32> to vector<8x32xf32>
    %162 = arith.mulf %125, %158 : vector<8x32xf32>
    %163 = arith.mulf %161, %159 : vector<8x32xf32>
    %164 = arith.addf %162, %163 : vector<8x32xf32>
    %165 = math.tanh %164 : vector<8x32xf32>
    %166 = arith.mulf %165, %160 : vector<8x32xf32>
    %167 = tpu.concatenate %166, %144 in 1 : vector<8x32xf32>, vector<8x32xf32> -> vector<8x64xf32>
    %cst_53 = arith.constant dense<0.000000e+00> : vector<8x128xf32>
    %168 = tpu.matmul %167, %13, %cst_53 {dimension_numbers = #tpu.dot_dimension_numbers<[1], [0], [0], [1], [0, 0, 1, 1], [], []>} : vector<8x64xf32>, vector<64x128xf32>, vector<8x128xf32> -> vector<8x128xf32>
    %169 = vector.broadcast %14 : vector<1x128xf32> to vector<8x128xf32>
    %170 = arith.addf %168, %169 : vector<8x128xf32>
    %171 = arith.mulf %170, %20 : vector<8x128xf32>
    %172 = math.tanh %171 : vector<8x128xf32>
    %173 = arith.mulf %172, %20 : vector<8x128xf32>
    %174 = arith.addf %173, %23 : vector<8x128xf32>
    %175 = vector.extract_strided_slice %174 {offsets = [0, 0], sizes = [8, 32], strides = [1, 1]} : vector<8x128xf32> to vector<8x32xf32>
    %176 = vector.extract_strided_slice %174 {offsets = [0, 32], sizes = [8, 32], strides = [1, 1]} : vector<8x128xf32> to vector<8x32xf32>
    %177 = vector.extract_strided_slice %174 {offsets = [0, 64], sizes = [8, 32], strides = [1, 1]} : vector<8x128xf32> to vector<8x32xf32>
    %178 = vector.extract_strided_slice %174 {offsets = [0, 96], sizes = [8, 32], strides = [1, 1]} : vector<8x128xf32> to vector<8x32xf32>
    %179 = arith.mulf %142, %175 : vector<8x32xf32>
    %180 = arith.mulf %178, %176 : vector<8x32xf32>
    %181 = arith.addf %179, %180 : vector<8x32xf32>
    %182 = math.tanh %181 : vector<8x32xf32>
    %183 = arith.mulf %182, %177 : vector<8x32xf32>
    %184 = arith.index_cast %c3_i32 : i32 to index
    %c0_54 = arith.constant 0 : index
    %c0_55 = arith.constant 0 : index
    %185 = vector.load %arg9[%184, %c0_54, %c0_55] : memref<4x8x32xf32, #tpu.memory_space<vmem>>, vector<1x8x32xf32>
    %186 = vector.shape_cast %185 : vector<1x8x32xf32> to vector<8x32xf32>
    %187 = vector.shape_cast %183 : vector<8x32xf32> to vector<1x8x32xf32>
    tpu.vector_store %arg9[%184, %c0_54, %c0_55], %187 {strides = array<i32>} : memref<4x8x32xf32, #tpu.memory_space<vmem>>, vector<1x8x32xf32>,
    %c4_i32 = arith.constant 4 : i32
    %c0_56 = arith.constant 0 : index
    %c0_57 = arith.constant 0 : index
    %c0_58 = arith.constant 0 : index
    %188 = vector.load %arg11[%c0_56, %c0_57, %c0_58] : memref<2x8x32xf32, #tpu.memory_space<vmem>>, vector<1x8x32xf32>
    %189 = vector.shape_cast %188 : vector<1x8x32xf32> to vector<8x32xf32>
    %190 = vector.shape_cast %166 : vector<8x32xf32> to vector<1x8x32xf32>
    tpu.vector_store %arg11[%c0_56, %c0_57, %c0_58], %190 {strides = array<i32>} : memref<2x8x32xf32, #tpu.memory_space<vmem>>, vector<1x8x32xf32>,
    %c0_59 = arith.constant 0 : index
    %c0_60 = arith.constant 0 : index
    %c0_61 = arith.constant 0 : index
    %191 = vector.load %arg12[%c0_59, %c0_60, %c0_61] : memref<2x8x32xf32, #tpu.memory_space<vmem>>, vector<1x8x32xf32>
    %192 = vector.shape_cast %191 : vector<1x8x32xf32> to vector<8x32xf32>
    %193 = vector.shape_cast %164 : vector<8x32xf32> to vector<1x8x32xf32>
    tpu.vector_store %arg12[%c0_59, %c0_60, %c0_61], %193 {strides = array<i32>} : memref<2x8x32xf32, #tpu.memory_space<vmem>>, vector<1x8x32xf32>,
    %c1_62 = arith.constant 1 : index
    %c0_63 = arith.constant 0 : index
    %c0_64 = arith.constant 0 : index
    %194 = vector.load %arg11[%c1_62, %c0_63, %c0_64] : memref<2x8x32xf32, #tpu.memory_space<vmem>>, vector<1x8x32xf32>
    %195 = vector.shape_cast %194 : vector<1x8x32xf32> to vector<8x32xf32>
    %196 = vector.shape_cast %183 : vector<8x32xf32> to vector<1x8x32xf32>
    tpu.vector_store %arg11[%c1_62, %c0_63, %c0_64], %196 {strides = array<i32>} : memref<2x8x32xf32, #tpu.memory_space<vmem>>, vector<1x8x32xf32>,
    %c1_65 = arith.constant 1 : index
    %c0_66 = arith.constant 0 : index
    %c0_67 = arith.constant 0 : index
    %197 = vector.load %arg12[%c1_65, %c0_66, %c0_67] : memref<2x8x32xf32, #tpu.memory_space<vmem>>, vector<1x8x32xf32>
    %198 = vector.shape_cast %197 : vector<1x8x32xf32> to vector<8x32xf32>
    %199 = vector.shape_cast %181 : vector<8x32xf32> to vector<1x8x32xf32>
    tpu.vector_store %arg12[%c1_65, %c0_66, %c0_67], %199 {strides = array<i32>} : memref<2x8x32xf32, #tpu.memory_space<vmem>>, vector<1x8x32xf32>,
    return
  }
  func.func @transform_0(%arg0: i32) -> (i32, i32, i32) {
    %c0_i32 = arith.constant 0 : i32
    %c0_i32_0 = arith.constant 0 : i32
    %c0_i32_1 = arith.constant 0 : i32
    return %arg0, %c0_i32, %c0_i32_0 : i32, i32, i32
  }
  func.func @transform_1(%arg0: i32) -> (i32, i32, i32) {
    %c0_i32 = arith.constant 0 : i32
    %c0_i32_0 = arith.constant 0 : i32
    %c0_i32_1 = arith.constant 0 : i32
    %c0_i32_2 = arith.constant 0 : i32
    return %c0_i32, %c0_i32_0, %c0_i32_1 : i32, i32, i32
  }
  func.func @transform_2(%arg0: i32) -> (i32, i32, i32) {
    %c0_i32 = arith.constant 0 : i32
    %c0_i32_0 = arith.constant 0 : i32
    %c0_i32_1 = arith.constant 0 : i32
    %c0_i32_2 = arith.constant 0 : i32
    return %c0_i32, %c0_i32_0, %c0_i32_1 : i32, i32, i32
  }
  func.func @transform_3(%arg0: i32) -> (i32, i32) {
    %c0_i32 = arith.constant 0 : i32
    %c0_i32_0 = arith.constant 0 : i32
    %c0_i32_1 = arith.constant 0 : i32
    return %c0_i32, %c0_i32_0 : i32, i32
  }
  func.func @transform_4(%arg0: i32) -> (i32, i32) {
    %c0_i32 = arith.constant 0 : i32
    %c0_i32_0 = arith.constant 0 : i32
    %c0_i32_1 = arith.constant 0 : i32
    return %c0_i32, %c0_i32_0 : i32, i32
  }
  func.func @transform_5(%arg0: i32) -> (i32, i32) {
    %c0_i32 = arith.constant 0 : i32
    %c0_i32_0 = arith.constant 0 : i32
    %c0_i32_1 = arith.constant 0 : i32
    return %c0_i32, %c0_i32_0 : i32, i32
  }
  func.func @transform_6(%arg0: i32) -> (i32, i32) {
    %c0_i32 = arith.constant 0 : i32
    %c0_i32_0 = arith.constant 0 : i32
    %c0_i32_1 = arith.constant 0 : i32
    return %c0_i32, %c0_i32_0 : i32, i32
  }
  func.func @transform_7(%arg0: i32) -> (i32, i32) {
    %c0_i32 = arith.constant 0 : i32
    %c0_i32_0 = arith.constant 0 : i32
    %c0_i32_1 = arith.constant 0 : i32
    return %c0_i32, %c0_i32_0 : i32, i32
  }
  func.func @transform_8(%arg0: i32) -> (i32, i32, i32) {
    %c0_i32 = arith.constant 0 : i32
    %c0_i32_0 = arith.constant 0 : i32
    %c0_i32_1 = arith.constant 0 : i32
    return %arg0, %c0_i32, %c0_i32_0 : i32, i32, i32
  }
}

</mosaic_0001>

<llo_original>
// kernel: tpu_custom_call.1
$region0: #{tpu_custom_call.1}
  #allocation0 [shape = 'u32[]', space=smem, size = 0x4, offset = 0x4, fixed_abs, tag = 'smem constant byte address 0x4 - core index']
  #allocation1 [shape = 'u32[144,128]{1,0:T(1,128)}', space=vmem, size = 0x12000, scoped, tag = 'internal scratch']
  #allocation2 [shape = 'f32[4,8,128]{2,1,0:T(8,128)}', space=vmem, size = 0x4000, scoped, tag = 'scratch operand']
  #allocation3 [shape = 'f32[2,8,32]{2,1,0:T(8,128)}', space=vmem, size = 0x2000, scoped, tag = 'scratch operand']
  #allocation4 [shape = 'f32[2,8,32]{2,1,0:T(8,128)}', space=vmem, size = 0x2000, scoped, tag = 'scratch operand']
  %s0 = inlined_call_operand.hbm [shape: f32[12,8,16], index: 0, kind: input, shape index: {}]
  %s1 = inlined_call_operand.hbm [shape: f32[2,8,32], index: 1, kind: input, shape index: {}]
  %s2 = inlined_call_operand.hbm [shape: f32[2,8,32], index: 2, kind: input, shape index: {}]
  %s3 = inlined_call_operand.hbm [shape: f32[16,128], index: 3, kind: input, shape index: {}]
  %s4 = inlined_call_operand.hbm [shape: f32[32,128], index: 4, kind: input, shape index: {}]
  %s5 = inlined_call_operand.vmem [shape: f32[1,128], index: 5, kind: input, shape index: {}]
  %s6 = inlined_call_operand.hbm [shape: f32[64,128], index: 6, kind: input, shape index: {}]
  %s7 = inlined_call_operand.vmem [shape: f32[1,128], index: 7, kind: input, shape index: {}]
  %s8 = inlined_call_operand.hbm [shape: f32[12,8,32], index: 8, kind: output, shape index: {}]
  %s9 = sld [smem:[#allocation0]]
  $region93: #{tpu_custom_call.1} parent=0
    _
  %s11 = ssub.s32 1, %s9
  %s12 = scalar_select 0, %s11, %s9
  $region1: #{tpu_custom_call.1} parent=0
    #allocation5 [shape = 'u8[32768]{0}', space=vmem, size = 0x8000, scoped, tag = 'input window, operand 0']
    #allocation6 [shape = 's32[2]{0}', space=sflag, size = 0x8, scoped, tag = 'scoped memory for tpu_custom_call.1']
    #allocation7 [shape = 's32[2]{0}', space=sflag, size = 0x8, scoped, tag = 'scoped memory for tpu_custom_call.1']
    #allocation8 [shape = 'u8[8192]{0}', space=vmem, size = 0x2000, scoped, tag = 'input window, operand 1, single buffered']
    #allocation9 [shape = 's32[1]{0}', space=sflag, size = 0x4, scoped, tag = 'scoped memory for tpu_custom_call.1']
    #allocation10 [shape = 'u8[8192]{0}', space=vmem, size = 0x2000, scoped, tag = 'input window, operand 2, single buffered']
    #allocation11 [shape = 'u8[8192]{0}', space=vmem, size = 0x2000, scoped, tag = 'input window, operand 3, single buffered']
    #allocation12 [shape = 's32[1]{0}', space=sflag, size = 0x4, scoped, tag = 'scoped memory for tpu_custom_call.1']
    #allocation13 [shape = 'u8[16384]{0}', space=vmem, size = 0x4000, scoped, tag = 'input window, operand 4, single buffered']
    #allocation14 [shape = 'u8[32768]{0}', space=vmem, size = 0x8000, scoped, tag = 'input window, operand 6, single buffered']
    #allocation15 [shape = 's32[1]{0}', space=sflag, size = 0x4, scoped, tag = 'scoped memory for tpu_custom_call.1']
    #allocation16 [shape = 'u8[32768]{0}', space=vmem, size = 0x8000, scoped, tag = 'output window, operand 0']
    %13 = vsyncpa [#allocation6], 0
    %s14 = scalar_lea.sflag [#allocation6], 1
    %15 = vsyncpa %s14, 0
    %16 = vsyncpa [#allocation9], 0
    %17 = vsyncpa [#allocation12], 0
    %18 = vsyncpa [#allocation15], 0
    %19 = vsyncpa [#allocation7], 0
    %s20 = scalar_lea.sflag [#allocation7], 1
    %21 = vsyncpa %s20, 0
    loop: start=0, step=1, limit=5
    $region2: #{tpu_custom_call.1} parent=1 // loop_pre_header
      _
    $region3: #{tpu_custom_call.1} parent=1 // loop_header
      %s23 = sphi 0, %s27
      %p24 = scmp.ge.s32.totalorder %s23, 5
      %s33 = sphi 0, %s35
      %s36 = sphi 0, %s33
      %s37 = sphi 0, %s36
      %s53 = sphi 0, %s37
      %s57 = sphi 0, %s57
      %s59 = sphi 0, %s57
      %s60 = sphi 0, %s59
      %s74 = sphi 0, %s60
      %s78 = sphi 0, %s78
      %s80 = sphi 0, %s78
      %s81 = sphi 0, %s80
      %s95 = sphi 0, %s81
      %s99 = sphi 0, %s99
      %s101 = sphi 0, %s99
      %s102 = sphi 0, %s101
      %s116 = sphi 0, %s102
      %s120 = sphi 0, %s120
      %s122 = sphi 0, %s120
      %s123 = sphi 0, %s122
      %s137 = sphi 0, %s123
      %s141 = sphi 0, %s141
      %s143 = sphi 0, %s141
      %s144 = sphi 0, %s143
      %s158 = sphi 0, %s144
      %s162 = sphi 0, %s162
      %s164 = sphi 0, %s162
      %s165 = sphi 0, %s164
      %s179 = sphi 0, %s165
      %s183 = sphi 0, %s183
      %s185 = sphi 0, %s183
      %s186 = sphi 0, %s185
      %s200 = sphi 0, %s186
      %s206 = sphi 0, %s208
      %s209 = sphi 0, %s206
      %s210 = sphi 0, %s209
      %s226 = sphi 0, %s210
    $region4: #{tpu_custom_call.1} parent=1 // loop_header_branch
      %26 = sbr.rel (%p24) target = $region8
    $region5: #{tpu_custom_call.1} parent=1 // loop_body
      %s28 = ssub.s32 %s23, 1
      %s29 = ssub.s32 %s23, 2
      %s30 = sadd.s32 %s23, 1
      %s31 = ssub.s32 %s23, %s30
      %p32 = scmp.eq.s32.totalorder %s31, 0
      %s34 = sadd.s32 %s33, 1
      %s35 = scalar_select %p32, %s33, %s34
      %p38 = pneg %p32
      %p39 = scmp.eq.s32.totalorder %s23, 2
      %p40 = por %p38, %p39
      %p41 = scmp.ne.s32.totalorder %s33, %s36
      %p42 = scmp.eq.s32.totalorder %s23, 0
      %p43 = por %p41, %p42
      %p44 = scmp.ne.s32.totalorder %s33, %s36
      %p45 = scmp.eq.s32.totalorder %s28, 2
      %p46 = por %p44, %p45
      %p47 = scmp.ne.s32.totalorder %s36, %s37
      %p48 = scmp.eq.s32.totalorder %s28, 0
      %p49 = por %p47, %p48
      %p50 = scmp.ne.s32.totalorder %s36, %s37
      %p51 = scmp.eq.s32.totalorder %s29, 2
      %p52 = por %p50, %p51
      %p54 = scmp.ne.s32.totalorder %s37, %s53
      %p55 = scmp.eq.s32.totalorder %s29, 0
      %p56 = por %p54, %p55
      %s58 = sadd.s32 %s57, 1
      %p61 = scmp.eq.s32.totalorder %s23, 2
      %p62 = scmp.ne.s32.totalorder %s57, %s59
      %p63 = scmp.eq.s32.totalorder %s23, 0
      %p64 = por %p62, %p63
      %p65 = scmp.ne.s32.totalorder %s57, %s59
      %p66 = scmp.eq.s32.totalorder %s28, 2
      %p67 = por %p65, %p66
      %p68 = scmp.ne.s32.totalorder %s59, %s60
      %p69 = scmp.eq.s32.totalorder %s28, 0
      %p70 = por %p68, %p69
      %p71 = scmp.ne.s32.totalorder %s59, %s60
      %p72 = scmp.eq.s32.totalorder %s29, 2
      %p73 = por %p71, %p72
      %p75 = scmp.ne.s32.totalorder %s60, %s74
      %p76 = scmp.eq.s32.totalorder %s29, 0
      %p77 = por %p75, %p76
      %s79 = sadd.s32 %s78, 1
      %p82 = scmp.eq.s32.totalorder %s23, 2
      %p83 = scmp.ne.s32.totalorder %s78, %s80
      %p84 = scmp.eq.s32.totalorder %s23, 0
      %p85 = por %p83, %p84
      %p86 = scmp.ne.s32.totalorder %s78, %s80
      %p87 = scmp.eq.s32.totalorder %s28, 2
      %p88 = por %p86, %p87
      %p89 = scmp.ne.s32.totalorder %s80, %s81
      %p90 = scmp.eq.s32.totalorder %s28, 0
      %p91 = por %p89, %p90
      %p92 = scmp.ne.s32.totalorder %s80, %s81
      %p93 = scmp.eq.s32.totalorder %s29, 2
      %p94 = por %p92, %p93
      %p96 = scmp.ne.s32.totalorder %s81, %s95
      %p97 = scmp.eq.s32.totalorder %s29, 0
      %p98 = por %p96, %p97
      %s100 = sadd.s32 %s99, 1
      %p103 = scmp.eq.s32.totalorder %s23, 2
      %p104 = scmp.ne.s32.totalorder %s99, %s101
      %p105 = scmp.eq.s32.totalorder %s23, 0
      %p106 = por %p104, %p105
      %p107 = scmp.ne.s32.totalorder %s99, %s101
      %p108 = scmp.eq.s32.totalorder %s28, 2
      %p109 = por %p107, %p108
      %p110 = scmp.ne.s32.totalorder %s101, %s102
      %p111 = scmp.eq.s32.totalorder %s28, 0
      %p112 = por %p110, %p111
      %p113 = scmp.ne.s32.totalorder %s101, %s102
      %p114 = scmp.eq.s32.totalorder %s29, 2
      %p115 = por %p113, %p114
      %p117 = scmp.ne.s32.totalorder %s102, %s116
      %p118 = scmp.eq.s32.totalorder %s29, 0
      %p119 = por %p117, %p118
      %s121 = sadd.s32 %s120, 1
      %p124 = scmp.eq.s32.totalorder %s23, 2
      %p125 = scmp.ne.s32.totalorder %s120, %s122
      %p126 = scmp.eq.s32.totalorder %s23, 0
      %p127 = por %p125, %p126
      %p128 = scmp.ne.s32.totalorder %s120, %s122
      %p129 = scmp.eq.s32.totalorder %s28, 2
      %p130 = por %p128, %p129
      %p131 = scmp.ne.s32.totalorder %s122, %s123
      %p132 = scmp.eq.s32.totalorder %s28, 0
      %p133 = por %p131, %p132
      %p134 = scmp.ne.s32.totalorder %s122, %s123
      %p135 = scmp.eq.s32.totalorder %s29, 2
      %p136 = por %p134, %p135
      %p138 = scmp.ne.s32.totalorder %s123, %s137
      %p139 = scmp.eq.s32.totalorder %s29, 0
      %p140 = por %p138, %p139
      %s142 = sadd.s32 %s141, 1
      %p145 = scmp.eq.s32.totalorder %s23, 2
      %p146 = scmp.ne.s32.totalorder %s141, %s143
      %p147 = scmp.eq.s32.totalorder %s23, 0
      %p148 = por %p146, %p147
      %p149 = scmp.ne.s32.totalorder %s141, %s143
      %p150 = scmp.eq.s32.totalorder %s28, 2
      %p151 = por %p149, %p150
      %p152 = scmp.ne.s32.totalorder %s143, %s144
      %p153 = scmp.eq.s32.totalorder %s28, 0
      %p154 = por %p152, %p153
      %p155 = scmp.ne.s32.totalorder %s143, %s144
      %p156 = scmp.eq.s32.totalorder %s29, 2
      %p157 = por %p155, %p156
      %p159 = scmp.ne.s32.totalorder %s144, %s158
      %p160 = scmp.eq.s32.totalorder %s29, 0
      %p161 = por %p159, %p160
      %s163 = sadd.s32 %s162, 1
      %p166 = scmp.eq.s32.totalorder %s23, 2
      %p167 = scmp.ne.s32.totalorder %s162, %s164
      %p168 = scmp.eq.s32.totalorder %s23, 0
      %p169 = por %p167, %p168
      %p170 = scmp.ne.s32.totalorder %s162, %s164
      %p171 = scmp.eq.s32.totalorder %s28, 2
      %p172 = por %p170, %p171
      %p173 = scmp.ne.s32.totalorder %s164, %s165
      %p174 = scmp.eq.s32.totalorder %s28, 0
      %p175 = por %p173, %p174
      %p176 = scmp.ne.s32.totalorder %s164, %s165
      %p177 = scmp.eq.s32.totalorder %s29, 2
      %p178 = por %p176, %p177
      %p180 = scmp.ne.s32.totalorder %s165, %s179
      %p181 = scmp.eq.s32.totalorder %s29, 0
      %p182 = por %p180, %p181
      %s184 = sadd.s32 %s183, 1
      %p187 = scmp.eq.s32.totalorder %s23, 2
      %p188 = scmp.ne.s32.totalorder %s183, %s185
      %p189 = scmp.eq.s32.totalorder %s23, 0
      %p190 = por %p188, %p189
      %p191 = scmp.ne.s32.totalorder %s183, %s185
      %p192 = scmp.eq.s32.totalorder %s28, 2
      %p193 = por %p191, %p192
      %p194 = scmp.ne.s32.totalorder %s185, %s186
      %p195 = scmp.eq.s32.totalorder %s28, 0
      %p196 = por %p194, %p195
      %p197 = scmp.ne.s32.totalorder %s185, %s186
      %p198 = scmp.eq.s32.totalorder %s29, 2
      %p199 = por %p197, %p198
      %p201 = scmp.ne.s32.totalorder %s186, %s200
      %p202 = scmp.eq.s32.totalorder %s29, 0
      %p203 = por %p201, %p202
      %s204 = ssub.s32 %s23, %s30
      %p205 = scmp.eq.s32.totalorder %s204, 0
      %s207 = sadd.s32 %s206, 1
      %s208 = scalar_select %p205, %s206, %s207
      %p211 = pneg %p205
      %p212 = scmp.eq.s32.totalorder %s23, 2
      %p213 = por %p211, %p212
      %p214 = scmp.ne.s32.totalorder %s206, %s209
      %p215 = scmp.eq.s32.totalorder %s23, 0
      %p216 = por %p214, %p215
      %p217 = scmp.ne.s32.totalorder %s206, %s209
      %p218 = scmp.eq.s32.totalorder %s28, 2
      %p219 = por %p217, %p218
      %p220 = scmp.ne.s32.totalorder %s209, %s210
      %p221 = scmp.eq.s32.totalorder %s28, 0
      %p222 = por %p220, %p221
      %p223 = scmp.ne.s32.totalorder %s209, %s210
      %p224 = scmp.eq.s32.totalorder %s29, 2
      %p225 = por %p223, %p224
      %p227 = scmp.ne.s32.totalorder %s210, %s226
      %p228 = scmp.eq.s32.totalorder %s29, 0
      %p229 = por %p227, %p228
      %p230 = scmp.le.s32.totalorder 1, %s23
      %p231 = scmp.lt.s32.totalorder %s23, 4
      %p232 = pnand %p230, %p231
      %p233 = pneg %p232
      // Predicated region
      $region9: #{tpu_custom_call.1} parent=5 // pred_check
        _
      $region10: #{tpu_custom_call.1} parent=5 // pred_check_branch
        %235 = sbr.rel (%p232) target = $region12
      $region11: #{tpu_custom_call.1} parent=5 // pred_region
        %s236 = ssub.s32 %s23, 1
        // Predicated region
        $region13: #{tpu_custom_call.1} parent=11 // pred_check
          %p237 = pneg %p70
        $region14: #{tpu_custom_call.1} parent=11 // pred_check_branch
          %239 = sbr.rel (%p237) target = $region16
        $region15: #{tpu_custom_call.1} parent=11 // pred_region
          %s241 = ssub.s32 256, 256
          %242 = vsyncadd [#allocation9], %s241
          %s243 = sshll.u32 [#allocation8], 4
          %s244 = int_to_ptr.vmem [resolvable:$true] %s243
          %249 = dma.hbm_to_vmem [thread:$0]  %s1, 256, %s244, [#allocation9], 128, 128, 8
        $region16: #{tpu_custom_call.1} parent=11 // pred_fallthru
          _
        // Predicated region
        $region17: #{tpu_custom_call.1} parent=11 // pred_check
          %p250 = pneg %p91
        $region18: #{tpu_custom_call.1} parent=11 // pred_check_branch
          %252 = sbr.rel (%p250) target = $region20
        $region19: #{tpu_custom_call.1} parent=11 // pred_region
          %s254 = ssub.s32 256, 256
          %255 = vsyncadd [#allocation9], %s254
          %s256 = sshll.u32 [#allocation10], 4
          %s257 = int_to_ptr.vmem [resolvable:$true] %s256
          %262 = dma.hbm_to_vmem [thread:$0]  %s2, 256, %s257, [#allocation9], 128, 128, 8
        $region20: #{tpu_custom_call.1} parent=11 // pred_fallthru
          _
        // Predicated region
        $region21: #{tpu_custom_call.1} parent=11 // pred_check
          %p263 = pneg %p112
        $region22: #{tpu_custom_call.1} parent=11 // pred_check_branch
          %265 = sbr.rel (%p263) target = $region24
        $region23: #{tpu_custom_call.1} parent=11 // pred_region
          %s267 = ssub.s32 256, 256
          %268 = vsyncadd [#allocation12], %s267
          %s269 = sshll.u32 [#allocation11], 4
          %s270 = int_to_ptr.vmem [resolvable:$true] %s269
          %275 = dma.hbm_to_vmem [thread:$0]  %s3, 256, %s270, [#allocation12], 128, 128, 8
        $region24: #{tpu_custom_call.1} parent=11 // pred_fallthru
          _
        // Predicated region
        $region25: #{tpu_custom_call.1} parent=11 // pred_check
          %p276 = pneg %p133
        $region26: #{tpu_custom_call.1} parent=11 // pred_check_branch
          %278 = sbr.rel (%p276) target = $region28
        $region27: #{tpu_custom_call.1} parent=11 // pred_region
          %s280 = ssub.s32 512, 512
          %281 = vsyncadd [#allocation12], %s280
          %s282 = sshll.u32 [#allocation13], 4
          %s283 = int_to_ptr.vmem [resolvable:$true] %s282
          %288 = dma.hbm_to_vmem [thread:$0]  %s4, 512, %s283, [#allocation12], 128, 128, 8
        $region28: #{tpu_custom_call.1} parent=11 // pred_fallthru
          _
        // Predicated region
        $region29: #{tpu_custom_call.1} parent=11 // pred_check
          %p289 = pneg %p154
        $region30: #{tpu_custom_call.1} parent=11 // pred_check_branch
          %291 = sbr.rel (%p289) target = $region32
        $region31: #{tpu_custom_call.1} parent=11 // pred_region
          _
        $region32: #{tpu_custom_call.1} parent=11 // pred_fallthru
          _
        // Predicated region
        $region33: #{tpu_custom_call.1} parent=11 // pred_check
          %p292 = pneg %p175
        $region34: #{tpu_custom_call.1} parent=11 // pred_check_branch
          %294 = sbr.rel (%p292) target = $region36
        $region35: #{tpu_custom_call.1} parent=11 // pred_region
          %s296 = ssub.s32 1024, 1024
          %297 = vsyncadd [#allocation15], %s296
          %s298 = sshll.u32 [#allocation14], 4
          %s299 = int_to_ptr.vmem [resolvable:$true] %s298
          %304 = dma.hbm_to_vmem [thread:$0]  %s6, 1024, %s299, [#allocation15], 128, 128, 8
        $region36: #{tpu_custom_call.1} parent=11 // pred_fallthru
          _
        // Predicated region
        $region37: #{tpu_custom_call.1} parent=11 // pred_check
          %p305 = pneg %p196
        $region38: #{tpu_custom_call.1} parent=11 // pred_check_branch
          %307 = sbr.rel (%p305) target = $region40
        $region39: #{tpu_custom_call.1} parent=11 // pred_region
          _
        $region40: #{tpu_custom_call.1} parent=11 // pred_fallthru
          _
      $region12: #{tpu_custom_call.1} parent=5 // pred_fallthru
        _
      %p308 = scmp.lt.s32.totalorder %s23, 3
      // Predicated region
      $region41: #{tpu_custom_call.1} parent=5 // pred_check
        %p309 = pneg %p308
      $region42: #{tpu_custom_call.1} parent=5 // pred_check_branch
        %311 = sbr.rel (%p309) target = $region44
      $region43: #{tpu_custom_call.1} parent=5 // pred_region
        // Predicated region
        $region45: #{tpu_custom_call.1} parent=43 // pred_check
          %p312 = pneg %p43
        $region46: #{tpu_custom_call.1} parent=43 // pred_check_branch
          %314 = sbr.rel (%p312) target = $region48
        $region47: #{tpu_custom_call.1} parent=43 // pred_region
          %s315 = sand.u32 %s33, 1
          %s316 = scalar_lea.sflag [#allocation6], %s315
          %s317 = sand.u32 %s33, 1
          %s318 = smul.addr %s317, 32
          %s319 = scalar_lea.vmem [#allocation5], %s318
          %s320 = smul.u32 4, %s23
          %s322 = ssub.s32 512, 512
          %323 = vsyncadd %s316, %s322
          %s324 = smul.addr %s320, 128
          %s325 = scalar_lea.hbm %s0, %s324
          %s326 = sshll.u32 %s319, 4
          %s327 = int_to_ptr.vmem [resolvable:$true] %s326
          %332 = dma.hbm_to_vmem [thread:$0]  %s325, 512, %s327, %s316, 128, 128, 8
        $region48: #{tpu_custom_call.1} parent=43 // pred_fallthru
          _
      $region44: #{tpu_custom_call.1} parent=5 // pred_fallthru
        _
      %p333 = scmp.le.s32.totalorder 1, %s23
      %p334 = scmp.lt.s32.totalorder %s23, 4
      %p335 = pnand %p333, %p334
      %p336 = pneg %p335
      // Predicated region
      $region49: #{tpu_custom_call.1} parent=5 // pred_check
        _
      $region50: #{tpu_custom_call.1} parent=5 // pred_check_branch
        %338 = sbr.rel (%p335) target = $region52
      $region51: #{tpu_custom_call.1} parent=5 // pred_region
        %s339 = ssub.s32 %s23, 1
        %s340 = sand.u32 %s36, 1
        %s341 = scalar_lea.sflag [#allocation6], %s340
        %s342 = sand.u32 %s36, 1
        %s343 = smul.addr %s342, 32
        %s344 = scalar_lea.vmem [#allocation5], %s343
        // Predicated region
        $region53: #{tpu_custom_call.1} parent=51 // pred_check
          %p345 = pneg %p49
        $region54: #{tpu_custom_call.1} parent=51 // pred_check_branch
          %347 = sbr.rel (%p345) target = $region56
        $region55: #{tpu_custom_call.1} parent=51 // pred_region
          %348 = dma.done %s341, 512
        $region56: #{tpu_custom_call.1} parent=51 // pred_fallthru
          _
        // Predicated region
        $region57: #{tpu_custom_call.1} parent=51 // pred_check
          %p349 = pneg %p70
        $region58: #{tpu_custom_call.1} parent=51 // pred_check_branch
          %351 = sbr.rel (%p349) target = $region60
        $region59: #{tpu_custom_call.1} parent=51 // pred_region
          %352 = dma.done [#allocation9], 256
        $region60: #{tpu_custom_call.1} parent=51 // pred_fallthru
          _
        // Predicated region
        $region61: #{tpu_custom_call.1} parent=51 // pred_check
          %p353 = pneg %p91
        $region62: #{tpu_custom_call.1} parent=51 // pred_check_branch
          %355 = sbr.rel (%p353) target = $region64
        $region63: #{tpu_custom_call.1} parent=51 // pred_region
          %356 = dma.done [#allocation9], 256
        $region64: #{tpu_custom_call.1} parent=51 // pred_fallthru
          _
        // Predicated region
        $region65: #{tpu_custom_call.1} parent=51 // pred_check
          %p357 = pneg %p112
        $region66: #{tpu_custom_call.1} parent=51 // pred_check_branch
          %359 = sbr.rel (%p357) target = $region68
        $region67: #{tpu_custom_call.1} parent=51 // pred_region
          %360 = dma.done [#allocation12], 256
        $region68: #{tpu_custom_call.1} parent=51 // pred_fallthru
          _
        // Predicated region
        $region69: #{tpu_custom_call.1} parent=51 // pred_check
          %p361 = pneg %p133
        $region70: #{tpu_custom_call.1} parent=51 // pred_check_branch
          %363 = sbr.rel (%p361) target = $region72
        $region71: #{tpu_custom_call.1} parent=51 // pred_region
          %364 = dma.done [#allocation12], 512
        $region72: #{tpu_custom_call.1} parent=51 // pred_fallthru
          _
        // Predicated region
        $region73: #{tpu_custom_call.1} parent=51 // pred_check
          %p365 = pneg %p175
        $region74: #{tpu_custom_call.1} parent=51 // pred_check_branch
          %367 = sbr.rel (%p365) target = $region76
        $region75: #{tpu_custom_call.1} parent=51 // pred_region
          %368 = dma.done [#allocation15], 1024
        $region76: #{tpu_custom_call.1} parent=51 // pred_fallthru
          _
        %s369 = sand.u32 %s36, 1
        %s370 = scalar_lea.sflag [#allocation6], %s369
        %s371 = sand.u32 %s36, 1
        %s372 = smul.addr %s371, 32
        %s373 = scalar_lea.vmem [#allocation5], %s372
        %p374 = pneg %p49
        %p375 = pneg %p46
        %p376 = pneg %p70
        %p377 = pneg %p67
        %p378 = pneg %p91
        %p379 = pneg %p88
        %p380 = pneg %p112
        %p381 = pneg %p109
        %p382 = pneg %p133
        %p383 = pneg %p130
        %p384 = pneg %p154
        %p385 = pneg %p151
        %p386 = pneg %p175
        %p387 = pneg %p172
        %p388 = pneg %p196
        %p389 = pneg %p193
        %p390 = pneg %p222
        %p391 = pneg %p219
        %s392 = sand.u32 %s209, 1
        %s393 = scalar_lea.sflag [#allocation7], %s392
        %s394 = sand.u32 %s209, 1
        %s395 = smul.addr %s394, 32
        %s396 = scalar_lea.vmem [#allocation16], %s395
        %s397 = smul.u32 4, %s28
        %s398 = smul.u32 4, %s28
        %p399 = scmp.eq.s32.totalorder %s28, 0
        // Predicated region
        $region77: #{tpu_custom_call.1} parent=51 // pred_check
          %p400 = pneg %p399
        $region78: #{tpu_custom_call.1} parent=51 // pred_check_branch
          %402 = sbr.rel (%p400) target = $region80
        $region79: #{tpu_custom_call.1} parent=51 // pred_region
          %v403 = vld [vmem:[#allocation8] sm:$0xff]
          %v404 = vld [vmem:[#allocation8 + $0x8] sm:$0xff]
          %vm405 = vcmask 261120
          %406 = vst.msk [vmem:[#allocation3] sm:$0xff] %vm405, %v403
          %407 = vst.msk [vmem:[#allocation3 + $0x8] sm:$0xff] %vm405, %v404
          %v408 = vld [vmem:[#allocation10] sm:$0xff]
          %v409 = vld [vmem:[#allocation10 + $0x8] sm:$0xff]
          %410 = vst.msk [vmem:[#allocation4] sm:$0xff] %vm405, %v408
          %411 = vst.msk [vmem:[#allocation4 + $0x8] sm:$0xff] %vm405, %v409
        $region80: #{tpu_custom_call.1} parent=51 // pred_fallthru
          _
        %v412 = vld [vmem:[%s344] sm:$0xff]
        %v413 = vld [vmem:[%s344 + $0x8] sm:$0xff]
        %v414 = vld [vmem:[%s344 + $0x10] sm:$0xff]
        %v415 = vld [vmem:[%s344 + $0x18] sm:$0xff]
        %v416 = vld [vmem:[#allocation11] sm:$0xff]
        %v417 = vld [vmem:[#allocation11 + $0x8] sm:$0xff]
        %v418 = vld [vmem:[%s5] sm:$0x1]
        %v420 = vlaneseq
        %v421 = vshrl.u32 %v420, 7
        %v422 = vsub.s32 0, %v421
        %v423 = vrot.slane %v418, %v422
        %vm425 = vcmask 130048
        %v427 = vsel %vm425, %v412, 0
        %v430 = vsel %vm425, %v413, 0
        %v433 = vsel %vm425, %v414, 0
        %v436 = vsel %vm425, %v415, 0
        %438 = vmatprep.subr.mxu0 0.0
        %439 = vmatpush1.msra.mxu0 %v416
        %440 = vmatprep.subr.mxu0 0.0
        %441 = vmatpush1.msra.mxu0 %v417
        %442 = vmatprep.subr.mxu0 0.0
        %443 = vmatpush1.msra.mxu0 0.0
        %444 = vmatprep.subr.mxu0 0.0
        %445 = vmatpush1.msra.mxu0 0.0
        %446 = vmatprep.subr.mxu0 0.0
        %447 = vmatpush1.msra.mxu0 0.0
        %448 = vmatprep.subr.mxu0 0.0
        %449 = vmatpush1.msra.mxu0 0.0
        %450 = vmatprep.subr.mxu0 0.0
        %451 = vmatpush1.msra.mxu0 0.0
        %452 = vmatprep.subr.mxu0 0.0
        %453 = vmatpush1.msra.mxu0 0.0
        %454 = vmatprep.subr.mxu0 0.0
        %455 = vmatpush1.msra.mxu0 0.0
        %456 = vmatprep.subr.mxu0 0.0
        %457 = vmatpush1.msra.mxu0 0.0
        %458 = vmatprep.subr.mxu0 0.0
        %459 = vmatpush1.msra.mxu0 0.0
        %460 = vmatprep.subr.mxu0 0.0
        %461 = vmatpush1.msra.mxu0 0.0
        %462 = vmatprep.subr.mxu0 0.0
        %463 = vmatpush1.msra.mxu0 0.0
        %464 = vmatprep.subr.mxu0 0.0
        %465 = vmatpush1.msra.mxu0 0.0
        %466 = vmatprep.subr.mxu0 0.0
        %467 = vmatpush1.msra.mxu0 0.0
        %468 = vmatprep.subr.mxu0 0.0
        %469 = vmatpush1.msra.mxu0 0.0
        %470 = vmatprep.subr.mxu0 0.0
        %471 = vmatpush1.msra.mxu0 0.0
        %472 = vmatprep.subr.mxu0 0.0
        %473 = vmatpush1.msra.mxu0 0.0
        %474 = vmatprep.subr.mxu0 0.0
        %475 = vmatpush1.msra.mxu0 0.0
        %476 = vmatprep.subr.mxu0 0.0
        %477 = vmatpush1.msra.mxu0 0.0
        %478 = vmatprep.subr.mxu0 0.0
        %479 = vmatpush1.msra.mxu0 0.0
        %480 = vmatprep.subr.mxu0 0.0
        %481 = vmatpush1.msra.mxu0 0.0
        %482 = vmatprep.subr.mxu0 0.0
        %483 = vmatpush1.msra.mxu0 0.0
        %484 = vmatprep.subr.mxu0 0.0
        %485 = vmatpush1.msra.mxu0 0.0
        %486 = vmatprep.subr.mxu0 0.0
        %487 = vmatpush1.msra.mxu0 0.0
        %488 = vmatprep.subr.mxu0 0.0
        %489 = vmatpush1.msra.mxu0 0.0
        %490 = vmatprep.subr.mxu0 0.0
        %491 = vmatpush1.msra.mxu0 0.0
        %492 = vmatprep.subr.mxu0 0.0
        %493 = vmatpush1.msra.mxu0 0.0
        %494 = vmatprep.subr.mxu0 0.0
        %495 = vmatpush1.msra.mxu0 0.0
        %496 = vmatprep.subr.mxu0 0.0
        %497 = vmatpush1.msra.mxu0 0.0
        %498 = vmatprep.subr.mxu0 0.0
        %499 = vmatpush1.msra.mxu0 0.0
        %500 = vmatprep.subr.mxu0 0.0
        %501 = vmatpush1.msra.mxu0 0.0
        %502 = vmatprep.mubr.f32.mxu0 0.0
        %503 = vmatmul.mubr.f32.gmra.mrb[0].mxu0 %v427
        %v504 = vpop.f32.mrb[0].mxu0
        %v505 = vadd.f32 %v423, %v504
        %v506 = vpop.f32.mrb[0].mxu0
        %507 = vmatprep.mubr.f32.mxu0 0.0
        %508 = vmatmul.mubr.f32.gmra.mrb[0].mxu0 %v430
        %v509 = vpop.f32.mrb[0].mxu0
        %v510 = vadd.f32 %v423, %v509
        %v511 = vpop.f32.mrb[0].mxu0
        %512 = vmatprep.mubr.f32.mxu0 0.0
        %513 = vmatmul.mubr.f32.gmra.mrb[0].mxu0 %v433
        %v514 = vpop.f32.mrb[0].mxu0
        %v515 = vadd.f32 %v423, %v514
        %v516 = vpop.f32.mrb[0].mxu0
        %517 = vmatprep.mubr.f32.mxu0 0.0
        %518 = vmatmul.mubr.f32.gmra.mrb[0].mxu0 %v436
        %v519 = vpop.f32.mrb[0].mxu0
        %v520 = vadd.f32 %v423, %v519
        %v521 = vpop.f32.mrb[0].mxu0
        %522 = vdwg.mxu0
        %523 = vst [vmem:[#allocation2] sm:$0xff] %v505
        %524 = vst [vmem:[#allocation2 + $0x8] sm:$0xff] %v510
        %525 = vst [vmem:[#allocation2 + $0x10] sm:$0xff] %v515
        %526 = vst [vmem:[#allocation2 + $0x18] sm:$0xff] %v520
        %v527 = vld [vmem:[#allocation13] sm:$0xff]
        %v528 = vld [vmem:[#allocation13 + $0x8] sm:$0xff]
        %v529 = vld [vmem:[#allocation13 + $0x10] sm:$0xff]
        %v530 = vld [vmem:[#allocation13 + $0x18] sm:$0xff]
        %v531 = vld [vmem:[#allocation14] sm:$0xff]
        %v532 = vld [vmem:[#allocation14 + $0x8] sm:$0xff]
        %v533 = vld [vmem:[#allocation14 + $0x10] sm:$0xff]
        %v534 = vld [vmem:[#allocation14 + $0x18] sm:$0xff]
        %v535 = vld [vmem:[#allocation14 + $0x20] sm:$0xff]
        %v536 = vld [vmem:[#allocation14 + $0x28] sm:$0xff]
        %v537 = vld [vmem:[#allocation14 + $0x30] sm:$0xff]
        %v538 = vld [vmem:[#allocation14 + $0x38] sm:$0xff]
        %v539 = vld [vmem:[%s7] sm:$0x1]
        %v540 = vlaneseq
        %v541 = vand.u32 %v540, 127
        %vm542 = vcmp.lt.s32.totalorder %v541, 96
        %v543 = vsel %vm542, 0.5, 1.0
        %v544 = vsel %vm542, 0.5, 0.0
        %v545 = vld [vmem:[#allocation3] sm:$0xff]
        %s546 = scalar_lea.vmem [#allocation3], 8
        %v547 = vld [vmem:[%s546] sm:$0xff]
        %v548 = vld [vmem:[#allocation4] sm:$0xff]
        %s549 = scalar_lea.vmem [#allocation4], 8
        %v550 = vld [vmem:[%s549] sm:$0xff]
        %v551 = vld [vmem:[#allocation2] sm:$0xff]
        %vm552 = vcmask 261120
        %v554 = vsel %vm552, %v545, 0
        %556 = vmatprep.subr.mxu0 0.0
        %557 = vmatpush1.msra.mxu0 %v527
        %558 = vmatprep.subr.mxu0 0.0
        %559 = vmatpush1.msra.mxu0 %v528
        %560 = vmatprep.subr.mxu0 0.0
        %561 = vmatpush1.msra.mxu0 %v529
        %562 = vmatprep.subr.mxu0 0.0
        %563 = vmatpush1.msra.mxu0 %v530
        %564 = vmatprep.subr.mxu0 0.0
        %565 = vmatpush1.msra.mxu0 0.0
        %566 = vmatprep.subr.mxu0 0.0
        %567 = vmatpush1.msra.mxu0 0.0
        %568 = vmatprep.subr.mxu0 0.0
        %569 = vmatpush1.msra.mxu0 0.0
        %570 = vmatprep.subr.mxu0 0.0
        %571 = vmatpush1.msra.mxu0 0.0
        %572 = vmatprep.subr.mxu0 0.0
        %573 = vmatpush1.msra.mxu0 0.0
        %574 = vmatprep.subr.mxu0 0.0
        %575 = vmatpush1.msra.mxu0 0.0
        %576 = vmatprep.subr.mxu0 0.0
        %577 = vmatpush1.msra.mxu0 0.0
        %578 = vmatprep.subr.mxu0 0.0
        %579 = vmatpush1.msra.mxu0 0.0
        %580 = vmatprep.subr.mxu0 0.0
        %581 = vmatpush1.msra.mxu0 0.0
        %582 = vmatprep.subr.mxu0 0.0
        %583 = vmatpush1.msra.mxu0 0.0
        %584 = vmatprep.subr.mxu0 0.0
        %585 = vmatpush1.msra.mxu0 0.0
        %586 = vmatprep.subr.mxu0 0.0
        %587 = vmatpush1.msra.mxu0 0.0
        %588 = vmatprep.subr.mxu0 0.0
        %589 = vmatpush1.msra.mxu0 0.0
        %590 = vmatprep.subr.mxu0 0.0
        %591 = vmatpush1.msra.mxu0 0.0
        %592 = vmatprep.subr.mxu0 0.0
        %593 = vmatpush1.msra.mxu0 0.0
        %594 = vmatprep.subr.mxu0 0.0
        %595 = vmatpush1.msra.mxu0 0.0
        %596 = vmatprep.subr.mxu0 0.0
        %597 = vmatpush1.msra.mxu0 0.0
        %598 = vmatprep.subr.mxu0 0.0
        %599 = vmatpush1.msra.mxu0 0.0
        %600 = vmatprep.subr.mxu0 0.0
        %601 = vmatpush1.msra.mxu0 0.0
        %602 = vmatprep.subr.mxu0 0.0
        %603 = vmatpush1.msra.mxu0 0.0
        %604 = vmatprep.subr.mxu0 0.0
        %605 = vmatpush1.msra.mxu0 0.0
        %606 = vmatprep.subr.mxu0 0.0
        %607 = vmatpush1.msra.mxu0 0.0
        %608 = vmatprep.subr.mxu0 0.0
        %609 = vmatpush1.msra.mxu0 0.0
        %610 = vmatprep.subr.mxu0 0.0
        %611 = vmatpush1.msra.mxu0 0.0
        %612 = vmatprep.subr.mxu0 0.0
        %613 = vmatpush1.msra.mxu0 0.0
        %614 = vmatprep.subr.mxu0 0.0
        %615 = vmatpush1.msra.mxu0 0.0
        %616 = vmatprep.subr.mxu0 0.0
        %617 = vmatpush1.msra.mxu0 0.0
        %618 = vmatprep.subr.mxu0 0.0
        %619 = vmatpush1.msra.mxu0 0.0
        %620 = vmatprep.mubr.f32.mxu0 0.0
        %621 = vmatmul.mubr.f32.gmra.mrb[0].mxu0 %v554
        %v622 = vpop.f32.mrb[0].mxu0
        %v623 = vadd.f32 0.0, %v622
        %v624 = vpop.f32.mrb[0].mxu0
        %625 = vdwg.mxu0
        %v626 = vadd.f32 %v551, %v623
        %v627 = vmul.f32 %v626, %v543
        %v628 = vtanh.pop %v627
        %v629 = vmul.f32 %v628, %v543
        %v630 = vadd.f32 %v629, %v544
        %v631 = vmul.f32 %v548, %v630
        %633 = vrot.lane.b32.xlu0 %v630, 64
        %v634 = vpop.permute.xlu0 %633
        %v636 = vmul.f32 %v630, %v634
        %638 = vrot.lane.b32.xlu0 %v636, 32
        %v639 = vpop.permute.xlu0 %638
        %v641 = vadd.f32 %v631, %v639
        %v642 = vtanh.pop %v641
        %v643 = vmul.f32 %v642, %v634
        %645 = vrot.lane.b32.xlu0 %v547, 32
        %v646 = vpop.permute.xlu0 %645
        %v648 = vsel %vm552, %v643, %v646
        %v650 = vlaneseq
        %v651 = vshrl.u32 %v650, 7
        %v652 = vsub.s32 0, %v651
        %v653 = vrot.slane %v539, %v652
        %vm655 = vcmask 523264
        %v657 = vsel %vm655, %v648, 0
        %659 = vmatprep.subr.mxu0 0.0
        %660 = vmatpush1.msra.mxu0 %v531
        %661 = vmatprep.subr.mxu0 0.0
        %662 = vmatpush1.msra.mxu0 %v532
        %663 = vmatprep.subr.mxu0 0.0
        %664 = vmatpush1.msra.mxu0 %v533
        %665 = vmatprep.subr.mxu0 0.0
        %666 = vmatpush1.msra.mxu0 %v534
        %667 = vmatprep.subr.mxu0 0.0
        %668 = vmatpush1.msra.mxu0 %v535
        %669 = vmatprep.subr.mxu0 0.0
        %670 = vmatpush1.msra.mxu0 %v536
        %671 = vmatprep.subr.mxu0 0.0
        %672 = vmatpush1.msra.mxu0 %v537
        %673 = vmatprep.subr.mxu0 0.0
        %674 = vmatpush1.msra.mxu0 %v538
        %675 = vmatprep.subr.mxu0 0.0
        %676 = vmatpush1.msra.mxu0 0.0
        %677 = vmatprep.subr.mxu0 0.0
        %678 = vmatpush1.msra.mxu0 0.0
        %679 = vmatprep.subr.mxu0 0.0
        %680 = vmatpush1.msra.mxu0 0.0
        %681 = vmatprep.subr.mxu0 0.0
        %682 = vmatpush1.msra.mxu0 0.0
        %683 = vmatprep.subr.mxu0 0.0
        %684 = vmatpush1.msra.mxu0 0.0
        %685 = vmatprep.subr.mxu0 0.0
        %686 = vmatpush1.msra.mxu0 0.0
        %687 = vmatprep.subr.mxu0 0.0
        %688 = vmatpush1.msra.mxu0 0.0
        %689 = vmatprep.subr.mxu0 0.0
        %690 = vmatpush1.msra.mxu0 0.0
        %691 = vmatprep.subr.mxu0 0.0
        %692 = vmatpush1.msra.mxu0 0.0
        %693 = vmatprep.subr.mxu0 0.0
        %694 = vmatpush1.msra.mxu0 0.0
        %695 = vmatprep.subr.mxu0 0.0
        %696 = vmatpush1.msra.mxu0 0.0
        %697 = vmatprep.subr.mxu0 0.0
        %698 = vmatpush1.msra.mxu0 0.0
        %699 = vmatprep.subr.mxu0 0.0
        %700 = vmatpush1.msra.mxu0 0.0
        %701 = vmatprep.subr.mxu0 0.0
        %702 = vmatpush1.msra.mxu0 0.0
        %703 = vmatprep.subr.mxu0 0.0
        %704 = vmatpush1.msra.mxu0 0.0
        %705 = vmatprep.subr.mxu0 0.0
        %706 = vmatpush1.msra.mxu0 0.0
        %707 = vmatprep.subr.mxu0 0.0
        %708 = vmatpush1.msra.mxu0 0.0
        %709 = vmatprep.subr.mxu0 0.0
        %710 = vmatpush1.msra.mxu0 0.0
        %711 = vmatprep.subr.mxu0 0.0
        %712 = vmatpush1.msra.mxu0 0.0
        %713 = vmatprep.subr.mxu0 0.0
        %714 = vmatpush1.msra.mxu0 0.0
        %715 = vmatprep.subr.mxu0 0.0
        %716 = vmatpush1.msra.mxu0 0.0
        %717 = vmatprep.subr.mxu0 0.0
        %718 = vmatpush1.msra.mxu0 0.0
        %719 = vmatprep.subr.mxu0 0.0
        %720 = vmatpush1.msra.mxu0 0.0
        %721 = vmatprep.subr.mxu0 0.0
        %722 = vmatpush1.msra.mxu0 0.0
        %723 = vmatprep.mubr.f32.mxu0 0.0
        %724 = vmatmul.mubr.f32.gmra.mrb[0].mxu0 %v657
        %v725 = vpop.f32.mrb[0].mxu0
        %v726 = vadd.f32 %v653, %v725
        %v727 = vpop.f32.mrb[0].mxu0
        %728 = vdwg.mxu0
        %v729 = vmul.f32 %v726, %v543
        %v730 = vtanh.pop %v729
        %v731 = vmul.f32 %v730, %v543
        %v732 = vadd.f32 %v731, %v544
        %v733 = vmul.f32 %v550, %v732
        %735 = vrot.lane.b32.xlu0 %v732, 64
        %v736 = vpop.permute.xlu0 %735
        %v738 = vmul.f32 %v732, %v736
        %740 = vrot.lane.b32.xlu0 %v738, 32
        %v741 = vpop.permute.xlu0 %740
        %v743 = vadd.f32 %v733, %v741
        %v744 = vtanh.pop %v743
        %v745 = vmul.f32 %v744, %v736
        %746 = vst.msk [vmem:[%s396] sm:$0xff] %vm552, %v745
        %s747 = scalar_lea.vmem [#allocation2], 8
        %v748 = vld [vmem:[%s747] sm:$0xff]
        %v750 = vsel %vm552, %v643, 0
        %752 = vmatprep.subr.mxu0 0.0
        %753 = vmatpush1.msra.mxu0 %v527
        %754 = vmatprep.subr.mxu0 0.0
        %755 = vmatpush1.msra.mxu0 %v528
        %756 = vmatprep.subr.mxu0 0.0
        %757 = vmatpush1.msra.mxu0 %v529
        %758 = vmatprep.subr.mxu0 0.0
        %759 = vmatpush1.msra.mxu0 %v530
        %760 = vmatprep.subr.mxu0 0.0
        %761 = vmatpush1.msra.mxu0 0.0
        %762 = vmatprep.subr.mxu0 0.0
        %763 = vmatpush1.msra.mxu0 0.0
        %764 = vmatprep.subr.mxu0 0.0
        %765 = vmatpush1.msra.mxu0 0.0
        %766 = vmatprep.subr.mxu0 0.0
        %767 = vmatpush1.msra.mxu0 0.0
        %768 = vmatprep.subr.mxu0 0.0
        %769 = vmatpush1.msra.mxu0 0.0
        %770 = vmatprep.subr.mxu0 0.0
        %771 = vmatpush1.msra.mxu0 0.0
        %772 = vmatprep.subr.mxu0 0.0
        %773 = vmatpush1.msra.mxu0 0.0
        %774 = vmatprep.subr.mxu0 0.0
        %775 = vmatpush1.msra.mxu0 0.0
        %776 = vmatprep.subr.mxu0 0.0
        %777 = vmatpush1.msra.mxu0 0.0
        %778 = vmatprep.subr.mxu0 0.0
        %779 = vmatpush1.msra.mxu0 0.0
        %780 = vmatprep.subr.mxu0 0.0
        %781 = vmatpush1.msra.mxu0 0.0
        %782 = vmatprep.subr.mxu0 0.0
        %783 = vmatpush1.msra.mxu0 0.0
        %784 = vmatprep.subr.mxu0 0.0
        %785 = vmatpush1.msra.mxu0 0.0
        %786 = vmatprep.subr.mxu0 0.0
        %787 = vmatpush1.msra.mxu0 0.0
        %788 = vmatprep.subr.mxu0 0.0
        %789 = vmatpush1.msra.mxu0 0.0
        %790 = vmatprep.subr.mxu0 0.0
        %791 = vmatpush1.msra.mxu0 0.0
        %792 = vmatprep.subr.mxu0 0.0
        %793 = vmatpush1.msra.mxu0 0.0
        %794 = vmatprep.subr.mxu0 0.0
        %795 = vmatpush1.msra.mxu0 0.0
        %796 = vmatprep.subr.mxu0 0.0
        %797 = vmatpush1.msra.mxu0 0.0
        %798 = vmatprep.subr.mxu0 0.0
        %799 = vmatpush1.msra.mxu0 0.0
        %800 = vmatprep.subr.mxu0 0.0
        %801 = vmatpush1.msra.mxu0 0.0
        %802 = vmatprep.subr.mxu0 0.0
        %803 = vmatpush1.msra.mxu0 0.0
        %804 = vmatprep.subr.mxu0 0.0
        %805 = vmatpush1.msra.mxu0 0.0
        %806 = vmatprep.subr.mxu0 0.0
        %807 = vmatpush1.msra.mxu0 0.0
        %808 = vmatprep.subr.mxu0 0.0
        %809 = vmatpush1.msra.mxu0 0.0
        %810 = vmatprep.subr.mxu0 0.0
        %811 = vmatpush1.msra.mxu0 0.0
        %812 = vmatprep.subr.mxu0 0.0
        %813 = vmatpush1.msra.mxu0 0.0
        %814 = vmatprep.subr.mxu0 0.0
        %815 = vmatpush1.msra.mxu0 0.0
        %816 = vmatprep.mubr.f32.mxu0 0.0
        %817 = vmatmul.mubr.f32.gmra.mrb[0].mxu0 %v750
        %v818 = vpop.f32.mrb[0].mxu0
        %v819 = vadd.f32 0.0, %v818
        %v820 = vpop.f32.mrb[0].mxu0
        %821 = vdwg.mxu0
        %v822 = vadd.f32 %v748, %v819
        %v823 = vmul.f32 %v822, %v543
        %v824 = vtanh.pop %v823
        %v825 = vmul.f32 %v824, %v543
        %v826 = vadd.f32 %v825, %v544
        %v827 = vmul.f32 %v641, %v826
        %829 = vrot.lane.b32.xlu0 %v826, 64
        %v830 = vpop.permute.xlu0 %829
        %v832 = vmul.f32 %v826, %v830
        %834 = vrot.lane.b32.xlu0 %v832, 32
        %v835 = vpop.permute.xlu0 %834
        %v837 = vadd.f32 %v827, %v835
        %v838 = vtanh.pop %v837
        %v839 = vmul.f32 %v838, %v830
        %841 = vrot.lane.b32.xlu0 %v745, 32
        %v842 = vpop.permute.xlu0 %841
        %v844 = vsel %vm552, %v839, %v842
        %v846 = vsel %vm655, %v844, 0
        %848 = vmatprep.subr.mxu0 0.0
        %849 = vmatpush1.msra.mxu0 %v531
        %850 = vmatprep.subr.mxu0 0.0
        %851 = vmatpush1.msra.mxu0 %v532
        %852 = vmatprep.subr.mxu0 0.0
        %853 = vmatpush1.msra.mxu0 %v533
        %854 = vmatprep.subr.mxu0 0.0
        %855 = vmatpush1.msra.mxu0 %v534
        %856 = vmatprep.subr.mxu0 0.0
        %857 = vmatpush1.msra.mxu0 %v535
        %858 = vmatprep.subr.mxu0 0.0
        %859 = vmatpush1.msra.mxu0 %v536
        %860 = vmatprep.subr.mxu0 0.0
        %861 = vmatpush1.msra.mxu0 %v537
        %862 = vmatprep.subr.mxu0 0.0
        %863 = vmatpush1.msra.mxu0 %v538
        %864 = vmatprep.subr.mxu0 0.0
        %865 = vmatpush1.msra.mxu0 0.0
        %866 = vmatprep.subr.mxu0 0.0
        %867 = vmatpush1.msra.mxu0 0.0
        %868 = vmatprep.subr.mxu0 0.0
        %869 = vmatpush1.msra.mxu0 0.0
        %870 = vmatprep.subr.mxu0 0.0
        %871 = vmatpush1.msra.mxu0 0.0
        %872 = vmatprep.subr.mxu0 0.0
        %873 = vmatpush1.msra.mxu0 0.0
        %874 = vmatprep.subr.mxu0 0.0
        %875 = vmatpush1.msra.mxu0 0.0
        %876 = vmatprep.subr.mxu0 0.0
        %877 = vmatpush1.msra.mxu0 0.0
        %878 = vmatprep.subr.mxu0 0.0
        %879 = vmatpush1.msra.mxu0 0.0
        %880 = vmatprep.subr.mxu0 0.0
        %881 = vmatpush1.msra.mxu0 0.0
        %882 = vmatprep.subr.mxu0 0.0
        %883 = vmatpush1.msra.mxu0 0.0
        %884 = vmatprep.subr.mxu0 0.0
        %885 = vmatpush1.msra.mxu0 0.0
        %886 = vmatprep.subr.mxu0 0.0
        %887 = vmatpush1.msra.mxu0 0.0
        %888 = vmatprep.subr.mxu0 0.0
        %889 = vmatpush1.msra.mxu0 0.0
        %890 = vmatprep.subr.mxu0 0.0
        %891 = vmatpush1.msra.mxu0 0.0
        %892 = vmatprep.subr.mxu0 0.0
        %893 = vmatpush1.msra.mxu0 0.0
        %894 = vmatprep.subr.mxu0 0.0
        %895 = vmatpush1.msra.mxu0 0.0
        %896 = vmatprep.subr.mxu0 0.0
        %897 = vmatpush1.msra.mxu0 0.0
        %898 = vmatprep.subr.mxu0 0.0
        %899 = vmatpush1.msra.mxu0 0.0
        %900 = vmatprep.subr.mxu0 0.0
        %901 = vmatpush1.msra.mxu0 0.0
        %902 = vmatprep.subr.mxu0 0.0
        %903 = vmatpush1.msra.mxu0 0.0
        %904 = vmatprep.subr.mxu0 0.0
        %905 = vmatpush1.msra.mxu0 0.0
        %906 = vmatprep.subr.mxu0 0.0
        %907 = vmatpush1.msra.mxu0 0.0
        %908 = vmatprep.subr.mxu0 0.0
        %909 = vmatpush1.msra.mxu0 0.0
        %910 = vmatprep.subr.mxu0 0.0
        %911 = vmatpush1.msra.mxu0 0.0
        %912 = vmatprep.mubr.f32.mxu0 0.0
        %913 = vmatmul.mubr.f32.gmra.mrb[0].mxu0 %v846
        %v914 = vpop.f32.mrb[0].mxu0
        %v915 = vadd.f32 %v653, %v914
        %v916 = vpop.f32.mrb[0].mxu0
        %917 = vdwg.mxu0
        %v918 = vmul.f32 %v915, %v543
        %v919 = vtanh.pop %v918
        %v920 = vmul.f32 %v919, %v543
        %v921 = vadd.f32 %v920, %v544
        %v922 = vmul.f32 %v743, %v921
        %924 = vrot.lane.b32.xlu0 %v921, 64
        %v925 = vpop.permute.xlu0 %924
        %v927 = vmul.f32 %v921, %v925
        %929 = vrot.lane.b32.xlu0 %v927, 32
        %v930 = vpop.permute.xlu0 %929
        %v932 = vadd.f32 %v922, %v930
        %v933 = vtanh.pop %v932
        %v934 = vmul.f32 %v933, %v925
        %s935 = scalar_lea.vmem %s396, 8 [#allocation16]
        %936 = vst.msk [vmem:[%s935] sm:$0xff] %vm552, %v934
        %s937 = scalar_lea.vmem [#allocation2], 16
        %v938 = vld [vmem:[%s937] sm:$0xff]
        %v940 = vsel %vm552, %v839, 0
        %942 = vmatprep.subr.mxu0 0.0
        %943 = vmatpush1.msra.mxu0 %v527
        %944 = vmatprep.subr.mxu0 0.0
        %945 = vmatpush1.msra.mxu0 %v528
        %946 = vmatprep.subr.mxu0 0.0
        %947 = vmatpush1.msra.mxu0 %v529
        %948 = vmatprep.subr.mxu0 0.0
        %949 = vmatpush1.msra.mxu0 %v530
        %950 = vmatprep.subr.mxu0 0.0
        %951 = vmatpush1.msra.mxu0 0.0
        %952 = vmatprep.subr.mxu0 0.0
        %953 = vmatpush1.msra.mxu0 0.0
        %954 = vmatprep.subr.mxu0 0.0
        %955 = vmatpush1.msra.mxu0 0.0
        %956 = vmatprep.subr.mxu0 0.0
        %957 = vmatpush1.msra.mxu0 0.0
        %958 = vmatprep.subr.mxu0 0.0
        %959 = vmatpush1.msra.mxu0 0.0
        %960 = vmatprep.subr.mxu0 0.0
        %961 = vmatpush1.msra.mxu0 0.0
        %962 = vmatprep.subr.mxu0 0.0
        %963 = vmatpush1.msra.mxu0 0.0
        %964 = vmatprep.subr.mxu0 0.0
        %965 = vmatpush1.msra.mxu0 0.0
        %966 = vmatprep.subr.mxu0 0.0
        %967 = vmatpush1.msra.mxu0 0.0
        %968 = vmatprep.subr.mxu0 0.0
        %969 = vmatpush1.msra.mxu0 0.0
        %970 = vmatprep.subr.mxu0 0.0
        %971 = vmatpush1.msra.mxu0 0.0
        %972 = vmatprep.subr.mxu0 0.0
        %973 = vmatpush1.msra.mxu0 0.0
        %974 = vmatprep.subr.mxu0 0.0
        %975 = vmatpush1.msra.mxu0 0.0
        %976 = vmatprep.subr.mxu0 0.0
        %977 = vmatpush1.msra.mxu0 0.0
        %978 = vmatprep.subr.mxu0 0.0
        %979 = vmatpush1.msra.mxu0 0.0
        %980 = vmatprep.subr.mxu0 0.0
        %981 = vmatpush1.msra.mxu0 0.0
        %982 = vmatprep.subr.mxu0 0.0
        %983 = vmatpush1.msra.mxu0 0.0
        %984 = vmatprep.subr.mxu0 0.0
        %985 = vmatpush1.msra.mxu0 0.0
        %986 = vmatprep.subr.mxu0 0.0
        %987 = vmatpush1.msra.mxu0 0.0
        %988 = vmatprep.subr.mxu0 0.0
        %989 = vmatpush1.msra.mxu0 0.0
        %990 = vmatprep.subr.mxu0 0.0
        %991 = vmatpush1.msra.mxu0 0.0
        %992 = vmatprep.subr.mxu0 0.0
        %993 = vmatpush1.msra.mxu0 0.0
        %994 = vmatprep.subr.mxu0 0.0
        %995 = vmatpush1.msra.mxu0 0.0
        %996 = vmatprep.subr.mxu0 0.0
        %997 = vmatpush1.msra.mxu0 0.0
        %998 = vmatprep.subr.mxu0 0.0
        %999 = vmatpush1.msra.mxu0 0.0
        %1000 = vmatprep.subr.mxu0 0.0
        %1001 = vmatpush1.msra.mxu0 0.0
        %1002 = vmatprep.subr.mxu0 0.0
        %1003 = vmatpush1.msra.mxu0 0.0
        %1004 = vmatprep.subr.mxu0 0.0
        %1005 = vmatpush1.msra.mxu0 0.0
        %1006 = vmatprep.mubr.f32.mxu0 0.0
        %1007 = vmatmul.mubr.f32.gmra.mrb[0].mxu0 %v940
        %v1008 = vpop.f32.mrb[0].mxu0
        %v1009 = vadd.f32 0.0, %v1008
        %v1010 = vpop.f32.mrb[0].mxu0
        %1011 = vdwg.mxu0
        %v1012 = vadd.f32 %v938, %v1009
        %v1013 = vmul.f32 %v1012, %v543
        %v1014 = vtanh.pop %v1013
        %v1015 = vmul.f32 %v1014, %v543
        %v1016 = vadd.f32 %v1015, %v544
        %v1017 = vmul.f32 %v837, %v1016
        %1019 = vrot.lane.b32.xlu0 %v1016, 64
        %v1020 = vpop.permute.xlu0 %1019
        %v1022 = vmul.f32 %v1016, %v1020
        %1024 = vrot.lane.b32.xlu0 %v1022, 32
        %v1025 = vpop.permute.xlu0 %1024
        %v1027 = vadd.f32 %v1017, %v1025
        %v1028 = vtanh.pop %v1027
        %v1029 = vmul.f32 %v1028, %v1020
        %1031 = vrot.lane.b32.xlu0 %v934, 32
        %v1032 = vpop.permute.xlu0 %1031
        %v1034 = vsel %vm552, %v1029, %v1032
        %v1036 = vsel %vm655, %v1034, 0
        %1038 = vmatprep.subr.mxu0 0.0
        %1039 = vmatpush1.msra.mxu0 %v531
        %1040 = vmatprep.subr.mxu0 0.0
        %1041 = vmatpush1.msra.mxu0 %v532
        %1042 = vmatprep.subr.mxu0 0.0
        %1043 = vmatpush1.msra.mxu0 %v533
        %1044 = vmatprep.subr.mxu0 0.0
        %1045 = vmatpush1.msra.mxu0 %v534
        %1046 = vmatprep.subr.mxu0 0.0
        %1047 = vmatpush1.msra.mxu0 %v535
        %1048 = vmatprep.subr.mxu0 0.0
        %1049 = vmatpush1.msra.mxu0 %v536
        %1050 = vmatprep.subr.mxu0 0.0
        %1051 = vmatpush1.msra.mxu0 %v537
        %1052 = vmatprep.subr.mxu0 0.0
        %1053 = vmatpush1.msra.mxu0 %v538
        %1054 = vmatprep.subr.mxu0 0.0
        %1055 = vmatpush1.msra.mxu0 0.0
        %1056 = vmatprep.subr.mxu0 0.0
        %1057 = vmatpush1.msra.mxu0 0.0
        %1058 = vmatprep.subr.mxu0 0.0
        %1059 = vmatpush1.msra.mxu0 0.0
        %1060 = vmatprep.subr.mxu0 0.0
        %1061 = vmatpush1.msra.mxu0 0.0
        %1062 = vmatprep.subr.mxu0 0.0
        %1063 = vmatpush1.msra.mxu0 0.0
        %1064 = vmatprep.subr.mxu0 0.0
        %1065 = vmatpush1.msra.mxu0 0.0
        %1066 = vmatprep.subr.mxu0 0.0
        %1067 = vmatpush1.msra.mxu0 0.0
        %1068 = vmatprep.subr.mxu0 0.0
        %1069 = vmatpush1.msra.mxu0 0.0
        %1070 = vmatprep.subr.mxu0 0.0
        %1071 = vmatpush1.msra.mxu0 0.0
        %1072 = vmatprep.subr.mxu0 0.0
        %1073 = vmatpush1.msra.mxu0 0.0
        %1074 = vmatprep.subr.mxu0 0.0
        %1075 = vmatpush1.msra.mxu0 0.0
        %1076 = vmatprep.subr.mxu0 0.0
        %1077 = vmatpush1.msra.mxu0 0.0
        %1078 = vmatprep.subr.mxu0 0.0
        %1079 = vmatpush1.msra.mxu0 0.0
        %1080 = vmatprep.subr.mxu0 0.0
        %1081 = vmatpush1.msra.mxu0 0.0
        %1082 = vmatprep.subr.mxu0 0.0
        %1083 = vmatpush1.msra.mxu0 0.0
        %1084 = vmatprep.subr.mxu0 0.0
        %1085 = vmatpush1.msra.mxu0 0.0
        %1086 = vmatprep.subr.mxu0 0.0
        %1087 = vmatpush1.msra.mxu0 0.0
        %1088 = vmatprep.subr.mxu0 0.0
        %1089 = vmatpush1.msra.mxu0 0.0
        %1090 = vmatprep.subr.mxu0 0.0
        %1091 = vmatpush1.msra.mxu0 0.0
        %1092 = vmatprep.subr.mxu0 0.0
        %1093 = vmatpush1.msra.mxu0 0.0
        %1094 = vmatprep.subr.mxu0 0.0
        %1095 = vmatpush1.msra.mxu0 0.0
        %1096 = vmatprep.subr.mxu0 0.0
        %1097 = vmatpush1.msra.mxu0 0.0
        %1098 = vmatprep.subr.mxu0 0.0
        %1099 = vmatpush1.msra.mxu0 0.0
        %1100 = vmatprep.subr.mxu0 0.0
        %1101 = vmatpush1.msra.mxu0 0.0
        %1102 = vmatprep.mubr.f32.mxu0 0.0
        %1103 = vmatmul.mubr.f32.gmra.mrb[0].mxu0 %v1036
        %v1104 = vpop.f32.mrb[0].mxu0
        %v1105 = vadd.f32 %v653, %v1104
        %v1106 = vpop.f32.mrb[0].mxu0
        %1107 = vdwg.mxu0
        %v1108 = vmul.f32 %v1105, %v543
        %v1109 = vtanh.pop %v1108
        %v1110 = vmul.f32 %v1109, %v543
        %v1111 = vadd.f32 %v1110, %v544
        %v1112 = vmul.f32 %v932, %v1111
        %1114 = vrot.lane.b32.xlu0 %v1111, 64
        %v1115 = vpop.permute.xlu0 %1114
        %v1117 = vmul.f32 %v1111, %v1115
        %1119 = vrot.lane.b32.xlu0 %v1117, 32
        %v1120 = vpop.permute.xlu0 %1119
        %v1122 = vadd.f32 %v1112, %v1120
        %v1123 = vtanh.pop %v1122
        %v1124 = vmul.f32 %v1123, %v1115
        %s1125 = scalar_lea.vmem %s396, 16 [#allocation16]
        %1126 = vst.msk [vmem:[%s1125] sm:$0xff] %vm552, %v1124
        %s1127 = scalar_lea.vmem [#allocation2], 24
        %v1128 = vld [vmem:[%s1127] sm:$0xff]
        %v1130 = vsel %vm552, %v1029, 0
        %1132 = vmatprep.subr.mxu0 0.0
        %1133 = vmatpush1.msra.mxu0 %v527
        %1134 = vmatprep.subr.mxu0 0.0
        %1135 = vmatpush1.msra.mxu0 %v528
        %1136 = vmatprep.subr.mxu0 0.0
        %1137 = vmatpush1.msra.mxu0 %v529
        %1138 = vmatprep.subr.mxu0 0.0
        %1139 = vmatpush1.msra.mxu0 %v530
        %1140 = vmatprep.subr.mxu0 0.0
        %1141 = vmatpush1.msra.mxu0 0.0
        %1142 = vmatprep.subr.mxu0 0.0
        %1143 = vmatpush1.msra.mxu0 0.0
        %1144 = vmatprep.subr.mxu0 0.0
        %1145 = vmatpush1.msra.mxu0 0.0
        %1146 = vmatprep.subr.mxu0 0.0
        %1147 = vmatpush1.msra.mxu0 0.0
        %1148 = vmatprep.subr.mxu0 0.0
        %1149 = vmatpush1.msra.mxu0 0.0
        %1150 = vmatprep.subr.mxu0 0.0
        %1151 = vmatpush1.msra.mxu0 0.0
        %1152 = vmatprep.subr.mxu0 0.0
        %1153 = vmatpush1.msra.mxu0 0.0
        %1154 = vmatprep.subr.mxu0 0.0
        %1155 = vmatpush1.msra.mxu0 0.0
        %1156 = vmatprep.subr.mxu0 0.0
        %1157 = vmatpush1.msra.mxu0 0.0
        %1158 = vmatprep.subr.mxu0 0.0
        %1159 = vmatpush1.msra.mxu0 0.0
        %1160 = vmatprep.subr.mxu0 0.0
        %1161 = vmatpush1.msra.mxu0 0.0
        %1162 = vmatprep.subr.mxu0 0.0
        %1163 = vmatpush1.msra.mxu0 0.0
        %1164 = vmatprep.subr.mxu0 0.0
        %1165 = vmatpush1.msra.mxu0 0.0
        %1166 = vmatprep.subr.mxu0 0.0
        %1167 = vmatpush1.msra.mxu0 0.0
        %1168 = vmatprep.subr.mxu0 0.0
        %1169 = vmatpush1.msra.mxu0 0.0
        %1170 = vmatprep.subr.mxu0 0.0
        %1171 = vmatpush1.msra.mxu0 0.0
        %1172 = vmatprep.subr.mxu0 0.0
        %1173 = vmatpush1.msra.mxu0 0.0
        %1174 = vmatprep.subr.mxu0 0.0
        %1175 = vmatpush1.msra.mxu0 0.0
        %1176 = vmatprep.subr.mxu0 0.0
        %1177 = vmatpush1.msra.mxu0 0.0
        %1178 = vmatprep.subr.mxu0 0.0
        %1179 = vmatpush1.msra.mxu0 0.0
        %1180 = vmatprep.subr.mxu0 0.0
        %1181 = vmatpush1.msra.mxu0 0.0
        %1182 = vmatprep.subr.mxu0 0.0
        %1183 = vmatpush1.msra.mxu0 0.0
        %1184 = vmatprep.subr.mxu0 0.0
        %1185 = vmatpush1.msra.mxu0 0.0
        %1186 = vmatprep.subr.mxu0 0.0
        %1187 = vmatpush1.msra.mxu0 0.0
        %1188 = vmatprep.subr.mxu0 0.0
        %1189 = vmatpush1.msra.mxu0 0.0
        %1190 = vmatprep.subr.mxu0 0.0
        %1191 = vmatpush1.msra.mxu0 0.0
        %1192 = vmatprep.subr.mxu0 0.0
        %1193 = vmatpush1.msra.mxu0 0.0
        %1194 = vmatprep.subr.mxu0 0.0
        %1195 = vmatpush1.msra.mxu0 0.0
        %1196 = vmatprep.mubr.f32.mxu0 0.0
        %1197 = vmatmul.mubr.f32.gmra.mrb[0].mxu0 %v1130
        %v1198 = vpop.f32.mrb[0].mxu0
        %v1199 = vadd.f32 0.0, %v1198
        %v1200 = vpop.f32.mrb[0].mxu0
        %1201 = vdwg.mxu0
        %v1202 = vadd.f32 %v1128, %v1199
        %v1203 = vmul.f32 %v1202, %v543
        %v1204 = vtanh.pop %v1203
        %v1205 = vmul.f32 %v1204, %v543
        %v1206 = vadd.f32 %v1205, %v544
        %v1207 = vmul.f32 %v1027, %v1206
        %1209 = vrot.lane.b32.xlu0 %v1206, 64
        %v1210 = vpop.permute.xlu0 %1209
        %v1212 = vmul.f32 %v1206, %v1210
        %1214 = vrot.lane.b32.xlu0 %v1212, 32
        %v1215 = vpop.permute.xlu0 %1214
        %v1217 = vadd.f32 %v1207, %v1215
        %v1218 = vtanh.pop %v1217
        %v1219 = vmul.f32 %v1218, %v1210
        %1221 = vrot.lane.b32.xlu0 %v1124, 32
        %v1222 = vpop.permute.xlu0 %1221
        %v1224 = vsel %vm552, %v1219, %v1222
        %v1226 = vsel %vm655, %v1224, 0
        %1228 = vmatprep.subr.mxu0 0.0
        %1229 = vmatpush1.msra.mxu0 %v531
        %1230 = vmatprep.subr.mxu0 0.0
        %1231 = vmatpush1.msra.mxu0 %v532
        %1232 = vmatprep.subr.mxu0 0.0
        %1233 = vmatpush1.msra.mxu0 %v533
        %1234 = vmatprep.subr.mxu0 0.0
        %1235 = vmatpush1.msra.mxu0 %v534
        %1236 = vmatprep.subr.mxu0 0.0
        %1237 = vmatpush1.msra.mxu0 %v535
        %1238 = vmatprep.subr.mxu0 0.0
        %1239 = vmatpush1.msra.mxu0 %v536
        %1240 = vmatprep.subr.mxu0 0.0
        %1241 = vmatpush1.msra.mxu0 %v537
        %1242 = vmatprep.subr.mxu0 0.0
        %1243 = vmatpush1.msra.mxu0 %v538
        %1244 = vmatprep.subr.mxu0 0.0
        %1245 = vmatpush1.msra.mxu0 0.0
        %1246 = vmatprep.subr.mxu0 0.0
        %1247 = vmatpush1.msra.mxu0 0.0
        %1248 = vmatprep.subr.mxu0 0.0
        %1249 = vmatpush1.msra.mxu0 0.0
        %1250 = vmatprep.subr.mxu0 0.0
        %1251 = vmatpush1.msra.mxu0 0.0
        %1252 = vmatprep.subr.mxu0 0.0
        %1253 = vmatpush1.msra.mxu0 0.0
        %1254 = vmatprep.subr.mxu0 0.0
        %1255 = vmatpush1.msra.mxu0 0.0
        %1256 = vmatprep.subr.mxu0 0.0
        %1257 = vmatpush1.msra.mxu0 0.0
        %1258 = vmatprep.subr.mxu0 0.0
        %1259 = vmatpush1.msra.mxu0 0.0
        %1260 = vmatprep.subr.mxu0 0.0
        %1261 = vmatpush1.msra.mxu0 0.0
        %1262 = vmatprep.subr.mxu0 0.0
        %1263 = vmatpush1.msra.mxu0 0.0
        %1264 = vmatprep.subr.mxu0 0.0
        %1265 = vmatpush1.msra.mxu0 0.0
        %1266 = vmatprep.subr.mxu0 0.0
        %1267 = vmatpush1.msra.mxu0 0.0
        %1268 = vmatprep.subr.mxu0 0.0
        %1269 = vmatpush1.msra.mxu0 0.0
        %1270 = vmatprep.subr.mxu0 0.0
        %1271 = vmatpush1.msra.mxu0 0.0
        %1272 = vmatprep.subr.mxu0 0.0
        %1273 = vmatpush1.msra.mxu0 0.0
        %1274 = vmatprep.subr.mxu0 0.0
        %1275 = vmatpush1.msra.mxu0 0.0
        %1276 = vmatprep.subr.mxu0 0.0
        %1277 = vmatpush1.msra.mxu0 0.0
        %1278 = vmatprep.subr.mxu0 0.0
        %1279 = vmatpush1.msra.mxu0 0.0
        %1280 = vmatprep.subr.mxu0 0.0
        %1281 = vmatpush1.msra.mxu0 0.0
        %1282 = vmatprep.subr.mxu0 0.0
        %1283 = vmatpush1.msra.mxu0 0.0
        %1284 = vmatprep.subr.mxu0 0.0
        %1285 = vmatpush1.msra.mxu0 0.0
        %1286 = vmatprep.subr.mxu0 0.0
        %1287 = vmatpush1.msra.mxu0 0.0
        %1288 = vmatprep.subr.mxu0 0.0
        %1289 = vmatpush1.msra.mxu0 0.0
        %1290 = vmatprep.subr.mxu0 0.0
        %1291 = vmatpush1.msra.mxu0 0.0
        %1292 = vmatprep.mubr.f32.mxu0 0.0
        %1293 = vmatmul.mubr.f32.gmra.mrb[0].mxu0 %v1226
        %v1294 = vpop.f32.mrb[0].mxu0
        %v1295 = vadd.f32 %v653, %v1294
        %v1296 = vpop.f32.mrb[0].mxu0
        %1297 = vdwg.mxu0
        %v1298 = vmul.f32 %v1295, %v543
        %v1299 = vtanh.pop %v1298
        %v1300 = vmul.f32 %v1299, %v543
        %v1301 = vadd.f32 %v1300, %v544
        %v1302 = vmul.f32 %v1122, %v1301
        %1304 = vrot.lane.b32.xlu0 %v1301, 64
        %v1305 = vpop.permute.xlu0 %1304
        %v1307 = vmul.f32 %v1301, %v1305
        %1309 = vrot.lane.b32.xlu0 %v1307, 32
        %v1310 = vpop.permute.xlu0 %1309
        %v1312 = vadd.f32 %v1302, %v1310
        %v1313 = vtanh.pop %v1312
        %v1314 = vmul.f32 %v1313, %v1305
        %s1315 = scalar_lea.vmem %s396, 24 [#allocation16]
        %1316 = vst.msk [vmem:[%s1315] sm:$0xff] %vm552, %v1314
        %1317 = vst.msk [vmem:[#allocation3] sm:$0xff] %vm552, %v1219
        %1318 = vst.msk [vmem:[#allocation4] sm:$0xff] %vm552, %v1217
        %1319 = vst.msk [vmem:[%s546] sm:$0xff] %vm552, %v1314
        %1320 = vst.msk [vmem:[%s549] sm:$0xff] %vm552, %v1312
        %s1321 = sand.u32 %s209, 1
        %s1322 = scalar_lea.sflag [#allocation7], %s1321
        %s1323 = sand.u32 %s209, 1
        %s1324 = smul.addr %s1323, 32
        %s1325 = scalar_lea.vmem [#allocation16], %s1324
        // Predicated region
        $region81: #{tpu_custom_call.1} parent=51 // pred_check
          %p1326 = pneg %p219
        $region82: #{tpu_custom_call.1} parent=51 // pred_check_branch
          %1328 = sbr.rel (%p1326) target = $region84
        $region83: #{tpu_custom_call.1} parent=51 // pred_region
          %s1329 = smul.u32 4, %s28
          %s1331 = ssub.s32 512, 512
          %1332 = vsyncadd %s1322, %s1331
          %s1333 = smul.addr %s1329, 128
          %s1334 = scalar_lea.hbm %s8, %s1333
          %s1335 = sshll.u32 %s1325, 4
          %s1336 = int_to_ptr.vmem [resolvable:$true] %s1335
          %1341 = dma.vmem_to_hbm [thread:$0]  %s1336, 512, %s1334, %s1322, 128, 128, 8
        $region84: #{tpu_custom_call.1} parent=51 // pred_fallthru
          _
      $region52: #{tpu_custom_call.1} parent=5 // pred_fallthru
        _
      %p1342 = scmp.le.s32.totalorder 2, %s23
      // Predicated region
      $region85: #{tpu_custom_call.1} parent=5 // pred_check
        %p1343 = pneg %p1342
      $region86: #{tpu_custom_call.1} parent=5 // pred_check_branch
        %1345 = sbr.rel (%p1343) target = $region88
      $region87: #{tpu_custom_call.1} parent=5 // pred_region
        %s1346 = ssub.s32 %s23, 2
        // Predicated region
        $region89: #{tpu_custom_call.1} parent=87 // pred_check
          %p1347 = pneg %p225
        $region90: #{tpu_custom_call.1} parent=87 // pred_check_branch
          %1349 = sbr.rel (%p1347) target = $region92
        $region91: #{tpu_custom_call.1} parent=87 // pred_region
          %s1350 = sand.u32 %s210, 1
          %s1351 = scalar_lea.sflag [#allocation7], %s1350
          %s1352 = sand.u32 %s210, 1
          %s1353 = smul.addr %s1352, 32
          %s1354 = scalar_lea.vmem [#allocation16], %s1353
          %1355 = dma.done %s1351, 512
        $region92: #{tpu_custom_call.1} parent=87 // pred_fallthru
          _
      $region88: #{tpu_custom_call.1} parent=5 // pred_fallthru
        _
    $region6: #{tpu_custom_call.1} parent=1 // loop_footer
      %s27 = sadd.s32 1, %s23
    $region7: #{tpu_custom_call.1} parent=1 // loop_footer_branch
      %22 = sbr.rel target = $region3
    $region8: #{tpu_custom_call.1} parent=1 // loop_exit
      _
    %1356 = vsyncpa [#allocation6], 1
    %s1357 = scalar_lea.sflag [#allocation6], 1
    %1358 = vsyncpa %s1357, 1
    %1359 = vsyncpa [#allocation9], 1
    %1360 = vsyncpa [#allocation12], 1
    %1361 = vsyncpa [#allocation15], 1
    %1362 = vsyncpa [#allocation7], 1
    %s1363 = scalar_lea.sflag [#allocation7], 1
    %1364 = vsyncpa %s1363, 1

</llo_original>
